<compile_context>
chip_gen: v7x
topology: tpu7x:2x2x1
jax: 0.10.0
libtpu: 0.0.40
codegen_flags: <defaults>
</compile_context>

<pallas_src>
import functools

import numpy as np
import jax
import jax.numpy as jnp
from jax import lax
from jax.experimental import pallas as pl
from jax.experimental.pallas import tpu as pltpu


# ------------------------------ helpers ------------------------------------ #

def _full_spec(shape):
    """Whole-array block (block == full array dims), grid=(1,)."""
    nd = len(shape)
    return pl.BlockSpec(shape, lambda *_: (0,) * nd)


def _layernorm(x, g, b, eps=1e-5):
    mu = jnp.mean(x, axis=-1, keepdims=True)
    var = jnp.mean((x - mu) ** 2, axis=-1, keepdims=True)
    return (x - mu) * lax.rsqrt(var + eps) * g + b


# Row layout of the packed (R_pad, >=128) parameter-vector slab.
_V_GCN_B, _V_ATTR_B, _V_TEMP_B, _V_QKV_B = 0, 1, 2, 3
_V_LN1_G, _V_LN1_B, _V_LN2_G, _V_LN2_B = 4, 5, 6, 7
_V_FFN1_B, _V_FFN2_B, _V_MLP1_B, _V_MLP2_B = 8, 9, 10, 11
_NUM_VEC_ROWS = 12


# --------------------------- fused forward kernel --------------------------- #

def _fused_forward_kernel(
    # data / graph
    a_norm_ref, x_ref, bases_ref, sel3_ref, s_src_ref, s_tgt_ref,
    # weight matrices
    gcn_w_ref, attr_w_ref, temp_w_ref, qkv_w_ref, gmat_ref,
    ffn1_w_ref, ffn2_w_ref, mlp1_w_ref, mlp2_w_ref,
    # packed 1-row params (biases, LN gamma/beta)
    vecs_ref,
    # output
    out_ref,
    *, emb, hidden, mlp_hidden, mvp, has_valid, has_edges, out_pad):
    f32 = jnp.float32

    def dot(a, b):
        return jnp.dot(a, b, preferred_element_type=f32)

    vec = vecs_ref[...]                       # (16, 128) -> load once

    def row(i, w):                            # static slice of the packed slab
        return vec[i, :w]

    # ---- GCNConv + ReLU: D^-1/2 (A+I) D^-1/2 X W + b ----
    h0 = jnp.maximum(
        dot(a_norm_ref[...], dot(x_ref[...], gcn_w_ref[...])) + row(_V_GCN_B, emb),
        0.0)

    # ---- TemporalDependencyModel ----
    attr = jnp.maximum(dot(h0, attr_w_ref[...]) + row(_V_ATTR_B, hidden), 0.0)      # (N, H)
    temp = jnp.maximum(dot(bases_ref[...], temp_w_ref[...]) + row(_V_TEMP_B, hidden),
                       0.0)                                                          # (1, H)
    node_emb = attr + temp                                                           # (N, H)

    # ---- row-select + intra/inter aggregation in ONE matmul ----
    # sel3 = [row-select ; adj*1/deg ; neighbor-mask*1/deg]  -> (3*Mvp, N)
    all3 = dot(sel3_ref[...], node_emb)                                              # (3*Mvp, H)
    emb_sel = all3[0:mvp]                                                            # (Mvp, H)

    if has_valid:
        # SpatialDependencyModel: intra_agg + (emb[vi] - mean(neighbor_emb))
        combined = all3[mvp:2 * mvp] + emb_sel - all3[2 * mvp:3 * mvp]               # (Mvp, H)

        # ---- TransformerBlock with sparse edge attention ----
        qkv = dot(combined, qkv_w_ref[...]) + row(_V_QKV_B, 3 * hidden)              # (Mvp, 3H)
        q = qkv[:, :hidden]                   # 1/sqrt(head_dim) folded into weights
        k = qkv[:, hidden:2 * hidden]
        v = qkv[:, 2 * hidden:3 * hidden]

        if has_edges:
            s_src = s_src_ref[...]                                                   # (E, Mvp)
            s_tgt = s_tgt_ref[...]                                                   # (E, Mvp)
            g = gmat_ref[...]                                                        # (H, NH)
            qe = dot(s_src, q)                                                       # (E, H)
            ke = dot(s_tgt, k)
            ve = dot(s_tgt, v)
            scores = dot(qe * ke, g)                                                 # (E, NH)
            # softmax over ALL kept edges per head (matches F.softmax(dim=0))
            m = jnp.max(scores, axis=0, keepdims=True)
            p = jnp.exp(scores - m)
            denom = jnp.sum(p, axis=0, keepdims=True)
            p = p * pl.reciprocal(denom, approx=True)
            # index_add_ over src then gather back (transposed contractions in-kernel)
            node_w = lax.dot_general(s_src, p, (((0,), (0,)), ((), ())),
                                     preferred_element_type=f32)                     # (Mvp, NH)
            aw = dot(s_src, node_w)                                                  # (E, NH)
            aw_full = lax.dot_general(aw, g, (((1,), (1,)), ((), ())),
                                      preferred_element_type=f32)                    # (E, H)
            attn = lax.dot_general(s_src, aw_full * ve, (((0,), (0,)), ((), ())),
                                   preferred_element_type=f32)                       # (Mvp, H)
            # TODO(synk): dropout(p=0.3) on attn is identity in eval mode; omitted.
            x1 = _layernorm(combined + attn, row(_V_LN1_G, hidden), row(_V_LN1_B, hidden))
        else:
            # no-edge branch of the reference TransformerBlock
            x1 = _layernorm(combined, row(_V_LN1_G, hidden), row(_V_LN1_B, hidden))

        ffn_h = jnp.maximum(dot(x1, ffn1_w_ref[...]) + row(_V_FFN1_B, 4 * hidden), 0.0)
        ffn_out = dot(ffn_h, ffn2_w_ref[...]) + row(_V_FFN2_B, hidden)
        fused = _layernorm(x1 + ffn_out, row(_V_LN2_G, hidden), row(_V_LN2_B, hidden))
    else:
        # reference fallback: fused = node_embeddings[index_obtains]
        fused = emb_sel

    # ---- MLP head ----
    h1 = jnp.maximum(dot(fused, mlp1_w_ref[...]) + row(_V_MLP1_B, mlp_hidden), 0.0)
    # TODO(synk): dropout(p=0.3) in MLP is identity in eval mode; omitted.
    pred = dot(h1, mlp2_w_ref[...]) + row(_V_MLP2_B, 1)                              # (Mvp, 1)

    # lane-dense output slab: [ fused | pred | zero padding ] -> (Mvp, out_pad)
    pad = out_pad - hidden - 1
    out_ref[...] = jnp.concatenate(
        [fused, pred, jnp.zeros((mvp, pad), f32)], axis=1)


# ----------------------------- parameter init ------------------------------ #

def init_params(key, input_dim, emb, hidden, n_bases, mlp_hidden):
    ks = jax.random.split(key, 8)

    def lin(k, fan_in, fan_out):
        kw, kb = jax.random.split(k)
        bound = 1.0 / np.sqrt(fan_in)
        w = jax.random.uniform(kw, (fan_in, fan_out), jnp.float32, -bound, bound)
        b = jax.random.uniform(kb, (fan_out,), jnp.float32, -bound, bound)
        return w, b

    p = {}
    p["gcn_w"], p["gcn_b"] = lin(ks[0], input_dim, emb)          # GCNConv
    p["attr_w"], p["attr_b"] = lin(ks[1], emb, hidden)           # attribute_embedding
    p["temp_w"], p["temp_b"] = lin(ks[2], 2 * n_bases, hidden)   # temporal linear
    p["qkv_w"], p["qkv_b"] = lin(ks[3], hidden, 3 * hidden)      # transformer qkv
    p["ffn1_w"], p["ffn1_b"] = lin(ks[4], hidden, 4 * hidden)
    p["ffn2_w"], p["ffn2_b"] = lin(ks[5], 4 * hidden, hidden)
    p["ln1_g"] = jnp.ones((hidden,), jnp.float32)
    p["ln1_b"] = jnp.zeros((hidden,), jnp.float32)
    p["ln2_g"] = jnp.ones((hidden,), jnp.float32)
    p["ln2_b"] = jnp.zeros((hidden,), jnp.float32)
    p["mlp1_w"], p["mlp1_b"] = lin(ks[6], hidden, mlp_hidden)
    p["mlp2_w"], p["mlp2_b"] = lin(ks[7], mlp_hidden, 1)
    return p


def prepare_params(p, input_dim, emb, hidden, n_bases, mlp_hidden, num_heads):
    """One-time param prep: fold attention scale into q weights, build the
    per-head grouping matrix, and pack all 1-row params into a single slab."""
    head_dim = hidden // num_heads
    scale = np.float32(1.0 / np.sqrt(head_dim))

    qkv_w = np.asarray(p["qkv_w"]).copy()
    qkv_b = np.asarray(p["qkv_b"]).copy()
    qkv_w[:, :hidden] *= scale
    qkv_b[:hidden] *= scale

    g = np.zeros((hidden, num_heads), np.float32)
    for h in range(num_heads):
        g[h * head_dim:(h + 1) * head_dim, h] = 1.0

    # packed 1-row parameter slab (lane-padded to a multiple of 128)
    wv = 128 * int(np.ceil(max(4 * hidden, 3 * hidden, emb, mlp_hidden, 1) / 128))
    rows = [None] * _NUM_VEC_ROWS
    rows[_V_GCN_B] = p["gcn_b"]
    rows[_V_ATTR_B] = p["attr_b"]
    rows[_V_TEMP_B] = p["temp_b"]
    rows[_V_QKV_B] = qkv_b
    rows[_V_LN1_G] = p["ln1_g"]
    rows[_V_LN1_B] = p["ln1_b"]
    rows[_V_LN2_G] = p["ln2_g"]
    rows[_V_LN2_B] = p["ln2_b"]
    rows[_V_FFN1_B] = p["ffn1_b"]
    rows[_V_FFN2_B] = p["ffn2_b"]
    rows[_V_MLP1_B] = p["mlp1_b"]
    rows[_V_MLP2_B] = p["mlp2_b"]
    rp = 8 * int(np.ceil(_NUM_VEC_ROWS / 8))
    vecs = np.zeros((rp, wv), np.float32)
    for i, v in enumerate(rows):
        v = np.asarray(v, np.float32).reshape(-1)
        vecs[i, :v.shape[0]] = v

    return {
        "gcn_w": jnp.asarray(p["gcn_w"]), "attr_w": jnp.asarray(p["attr_w"]),
        "temp_w": jnp.asarray(p["temp_w"]), "qkv_w": jnp.asarray(qkv_w),
        "gmat": jnp.asarray(g), "ffn1_w": jnp.asarray(p["ffn1_w"]),
        "ffn2_w": jnp.asarray(p["ffn2_w"]), "mlp1_w": jnp.asarray(p["mlp1_w"]),
        "mlp2_w": jnp.asarray(p["mlp2_w"]), "vecs": jnp.asarray(vecs),
        "dims": dict(input_dim=input_dim, emb=emb, hidden=hidden,
                     n_bases=n_bases, mlp_hidden=mlp_hidden, num_heads=num_heads),
    }


# ------------------------- per-graph precompute (host) ---------------------- #

def precompute_graph(adj_np, index_obtains):
    """Static graph bookkeeping (the PyTorch reference also does this in Python).
    Done ONCE per graph; the per-call path is a single kernel launch."""
    n = adj_np.shape[0]

    # GCN normalized adjacency (edges from adj>0, unweighted, + self loops)
    a_bin = (adj_np > 0).astype(np.float32)
    a_hat = a_bin + np.eye(n, dtype=np.float32)
    dinv = 1.0 / np.sqrt(a_hat.sum(axis=1))
    a_norm = (dinv[:, None] * a_hat * dinv[None, :]).astype(np.float32)

    valid = [int(vi) for vi in index_obtains if (adj_np[vi] > 0).sum() > 0]
    has_valid = len(valid) > 0
    rows = valid if has_valid else [int(v) for v in index_obtains]
    mv = len(rows)
    mvp = max(8, 8 * int(np.ceil(mv / 8)))       # sublane-aligned row count

    sel = np.zeros((mvp, n), np.float32)         # one-hot row gather
    sel[np.arange(mv), np.asarray(rows)] = 1.0
    adj_w = np.zeros((mvp, n), np.float32)       # weights * 1/deg  (intra_agg)
    nbr_m = np.zeros((mvp, n), np.float32)       # mask    * 1/deg  (neighbor mean)

    if has_valid:
        vnp = np.asarray(valid)
        mask = (adj_np[vnp] > 0).astype(np.float32)
        inv_deg = 1.0 / np.maximum(mask.sum(axis=1, keepdims=True), 1.0)
        adj_w[:mv] = adj_np[vnp].astype(np.float32) * inv_deg
        nbr_m[:mv] = mask * inv_deg
        # edges (row-major order, same as torch nonzero) kept iff both ends valid
        src_all, tgt_all = np.nonzero(adj_np)
        idx_map = {v: i for i, v in enumerate(valid)}
        kept = [(idx_map[int(s)], idx_map[int(t)])
                for s, t in zip(src_all, tgt_all)
                if int(s) in idx_map and int(t) in idx_map]
        has_edges = len(kept) > 0
        e = max(len(kept), 1)
        s_src = np.zeros((e, mvp), np.float32)
        s_tgt = np.zeros((e, mvp), np.float32)
        if has_edges:
            s_src[np.arange(len(kept)), [a for a, _ in kept]] = 1.0
            s_tgt[np.arange(len(kept)), [b for _, b in kept]] = 1.0
    else:
        has_edges = False
        s_src = np.zeros((1, mvp), np.float32)
        s_tgt = np.zeros((1, mvp), np.float32)

    sel3 = np.concatenate([sel, adj_w, nbr_m], axis=0)   # (3*mvp, n)
    return dict(
        a_norm=jnp.asarray(a_norm), sel3=jnp.asarray(sel3),
        s_src=jnp.asarray(s_src), s_tgt=jnp.asarray(s_tgt),
        has_valid=has_valid, has_edges=has_edges,
        mv=mv, mvp=mvp, out_rows=rows, valid=valid)


def temporal_bases(timestamp, n_bases):
    """Tiny (1, 2*n_bases) host-side temporal basis vector (same formula and
    exponent precedence as the PyTorch reference)."""
    t = float(timestamp)
    rows = np.zeros((n_bases, 2), np.float32)
    for i in range(n_bases):
        rows[i, 0] = np.sin(t / 10000.0 ** (2 * i / n_bases))
        rows[i, 1] = np.cos(t / 10000.0 ** (2 * i + 1.0 / n_bases))
    return jnp.asarray(rows.reshape(1, 2 * n_bases))


# ------------------------------- forward ----------------------------------- #

def combined_forward(prep, graph, x, bases):
    dims = prep["dims"]
    hidden = dims["hidden"]
    out_pad = 128 * max(1, pl.cdiv(hidden + 1, 128))   # lane-dense output width
    mvp = graph["mvp"]
    mv = graph["mv"]

    args = [
        graph["a_norm"], x, bases, graph["sel3"], graph["s_src"], graph["s_tgt"],
        prep["gcn_w"], prep["attr_w"], prep["temp_w"], prep["qkv_w"], prep["gmat"],
        prep["ffn1_w"], prep["ffn2_w"], prep["mlp1_w"], prep["mlp2_w"], prep["vecs"],
    ]

    kernel = functools.partial(
        _fused_forward_kernel,
        emb=dims["emb"], hidden=hidden, mlp_hidden=dims["mlp_hidden"],
        mvp=mvp, has_valid=graph["has_valid"], has_edges=graph["has_edges"],
        out_pad=out_pad)

    slab = pl.pallas_call(
        kernel,
        out_shape=jax.ShapeDtypeStruct((mvp, out_pad), jnp.float32),
        grid=(1,),
        in_specs=[_full_spec(a.shape) for a in args],
        out_specs=pl.BlockSpec((mvp, out_pad), lambda i: (0, 0)),
        compiler_params=pltpu.CompilerParams(
            dimension_semantics=("arbitrary",)),
    )(*args)

    fused = slab[:mv, :hidden]
    prediction = slab[:mv, hidden:hidden + 1]
    ret_idx = graph["valid"] if graph["has_valid"] else graph["out_rows"]
    return prediction, fused[None], None, ret_idx


# --------------------------------- main ------------------------------------ #

if __name__ == "__main__":
    key = jax.random.PRNGKey(0)
    k_x, k_adj, k_params = jax.random.split(key, 3)

    N = 16              # num nodes
    INPUT_DIM = 8       # data.x feature dim
    EMB = 16            # embedding_size
    HIDDEN = 16         # hidden_size (divisible by num_heads)
    NUM_HEADS = 4
    N_BASES = 4         # num_temporal_bases
    MLP_HIDDEN = 8
    # num_relations is unused by the reference forward pass.

    x = jax.random.normal(k_x, (N, INPUT_DIM), jnp.float32)
    u = jax.random.uniform(k_adj, (N, N), jnp.float32)
    adj = jnp.where(u > 0.7, u, 0.0) * (1.0 - jnp.eye(N, dtype=jnp.float32))
    adj_np = np.asarray(adj, np.float32)

    params = init_params(k_params, INPUT_DIM, EMB, HIDDEN, N_BASES, MLP_HIDDEN)
    prep = prepare_params(params, INPUT_DIM, EMB, HIDDEN, N_BASES, MLP_HIDDEN, NUM_HEADS)

    timestamp = 3.0
    index_obtains = [0, 1, 2, 3, 4, 5, 6, 7]

    graph = precompute_graph(adj_np, index_obtains)           # once per graph
    bases = temporal_bases(timestamp, N_BASES)                # once per timestamp

    prediction, fused, _, valid_indices = combined_forward(prep, graph, x, bases)

    jax.block_until_ready(prediction)
    jax.block_until_ready(fused)
    print("KERNEL_OK")
</pallas_src>

<mosaic_0001>
module attributes {stable_mosaic.version = 11 : i64} {
  func.func @_fused_forward_kernel(%arg0: i32, %arg1: memref<16x16xf32, #tpu.memory_space<vmem>>, %arg2: memref<16x8xf32, #tpu.memory_space<vmem>>, %arg3: memref<1x8xf32, #tpu.memory_space<vmem>>, %arg4: memref<24x16xf32, #tpu.memory_space<vmem>>, %arg5: memref<16x8xf32, #tpu.memory_space<vmem>>, %arg6: memref<16x8xf32, #tpu.memory_space<vmem>>, %arg7: memref<8x16xf32, #tpu.memory_space<vmem>>, %arg8: memref<16x16xf32, #tpu.memory_space<vmem>>, %arg9: memref<8x16xf32, #tpu.memory_space<vmem>>, %arg10: memref<16x48xf32, #tpu.memory_space<vmem>>, %arg11: memref<16x4xf32, #tpu.memory_space<vmem>>, %arg12: memref<16x64xf32, #tpu.memory_space<vmem>>, %arg13: memref<64x16xf32, #tpu.memory_space<vmem>>, %arg14: memref<16x8xf32, #tpu.memory_space<vmem>>, %arg15: memref<8x1xf32, #tpu.memory_space<vmem>>, %arg16: memref<16x128xf32, #tpu.memory_space<vmem>>, %arg17: memref<8x128xf32, #tpu.memory_space<vmem>>) attributes {dimension_semantics = [#tpu.dimension_semantics<arbitrary>], iteration_bounds = array<i64: 1>, scalar_prefetch = 0 : i64, scratch_operands = 0 : i64, tpu.core_type = #tpu.core_type<tc>, window_params = [{pipeline_mode = #tpu.pipeline_mode<synchronous>, transform_indices = @transform_0, window_bounds = array<i64: 16, 16>}, {pipeline_mode = #tpu.pipeline_mode<synchronous>, transform_indices = @transform_1, window_bounds = array<i64: 16, 8>}, {pipeline_mode = #tpu.pipeline_mode<synchronous>, transform_indices = @transform_2, window_bounds = array<i64: 1, 8>}, {pipeline_mode = #tpu.pipeline_mode<synchronous>, transform_indices = @transform_3, window_bounds = array<i64: 24, 16>}, {pipeline_mode = #tpu.pipeline_mode<synchronous>, transform_indices = @transform_4, window_bounds = array<i64: 16, 8>}, {pipeline_mode = #tpu.pipeline_mode<synchronous>, transform_indices = @transform_5, window_bounds = array<i64: 16, 8>}, {pipeline_mode = #tpu.pipeline_mode<synchronous>, transform_indices = @transform_6, window_bounds = array<i64: 8, 16>}, {pipeline_mode = #tpu.pipeline_mode<synchronous>, transform_indices = @transform_7, window_bounds = array<i64: 16, 16>}, {pipeline_mode = #tpu.pipeline_mode<synchronous>, transform_indices = @transform_8, window_bounds = array<i64: 8, 16>}, {pipeline_mode = #tpu.pipeline_mode<synchronous>, transform_indices = @transform_9, window_bounds = array<i64: 16, 48>}, {pipeline_mode = #tpu.pipeline_mode<synchronous>, transform_indices = @transform_10, window_bounds = array<i64: 16, 4>}, {pipeline_mode = #tpu.pipeline_mode<synchronous>, transform_indices = @transform_11, window_bounds = array<i64: 16, 64>}, {pipeline_mode = #tpu.pipeline_mode<synchronous>, transform_indices = @transform_12, window_bounds = array<i64: 64, 16>}, {pipeline_mode = #tpu.pipeline_mode<synchronous>, transform_indices = @transform_13, window_bounds = array<i64: 16, 8>}, {pipeline_mode = #tpu.pipeline_mode<synchronous>, transform_indices = @transform_14, window_bounds = array<i64: 8, 1>}, {pipeline_mode = #tpu.pipeline_mode<synchronous>, transform_indices = @transform_15, window_bounds = array<i64: 16, 128>}, {pipeline_mode = #tpu.pipeline_mode<synchronous>, transform_indices = @transform_16, window_bounds = array<i64: 8, 128>}]} {
    %c0 = arith.constant 0 : index
    %c0_0 = arith.constant 0 : index
    %0 = vector.load %arg16[%c0, %c0_0] : memref<16x128xf32, #tpu.memory_space<vmem>>, vector<16x128xf32>
    %c0_1 = arith.constant 0 : index
    %c0_2 = arith.constant 0 : index
    %1 = vector.load %arg1[%c0_1, %c0_2] : memref<16x16xf32, #tpu.memory_space<vmem>>, vector<16x16xf32>
    %c0_3 = arith.constant 0 : index
    %c0_4 = arith.constant 0 : index
    %2 = vector.load %arg2[%c0_3, %c0_4] : memref<16x8xf32, #tpu.memory_space<vmem>>, vector<16x8xf32>
    %c0_5 = arith.constant 0 : index
    %c0_6 = arith.constant 0 : index
    %3 = vector.load %arg7[%c0_5, %c0_6] : memref<8x16xf32, #tpu.memory_space<vmem>>, vector<8x16xf32>
    %cst = arith.constant dense<0.000000e+00> : vector<16x16xf32>
    %4 = tpu.matmul %2, %3, %cst {dimension_numbers = #tpu.dot_dimension_numbers<[1], [0], [0], [1], [0, 0, 1, 1], [], []>} : vector<16x8xf32>, vector<8x16xf32>, vector<16x16xf32> -> vector<16x16xf32>
    %cst_7 = arith.constant dense<0.000000e+00> : vector<16x16xf32>
    %5 = tpu.matmul %1, %4, %cst_7 {dimension_numbers = #tpu.dot_dimension_numbers<[1], [0], [0], [1], [0, 0, 1, 1], [], []>} : vector<16x16xf32>, vector<16x16xf32>, vector<16x16xf32> -> vector<16x16xf32>
    %6 = vector.extract_strided_slice %0 {offsets = [0, 0], sizes = [1, 16], strides = [1, 1]} : vector<16x128xf32> to vector<1x16xf32>
    %7 = vector.shape_cast %6 : vector<1x16xf32> to vector<16xf32>
    %8 = vector.shape_cast %7 : vector<16xf32> to vector<1x16xf32>
    %9 = vector.broadcast %8 : vector<1x16xf32> to vector<16x16xf32>
    %10 = arith.addf %5, %9 : vector<16x16xf32>
    %cst_8 = arith.constant 0.000000e+00 : f32
    %11 = vector.broadcast %cst_8 : f32 to vector<16x16xf32>
    %12 = arith.maximumf %10, %11 : vector<16x16xf32>
    %c0_9 = arith.constant 0 : index
    %c0_10 = arith.constant 0 : index
    %13 = vector.load %arg8[%c0_9, %c0_10] : memref<16x16xf32, #tpu.memory_space<vmem>>, vector<16x16xf32>
    %cst_11 = arith.constant dense<0.000000e+00> : vector<16x16xf32>
    %14 = tpu.matmul %12, %13, %cst_11 {dimension_numbers = #tpu.dot_dimension_numbers<[1], [0], [0], [1], [0, 0, 1, 1], [], []>} : vector<16x16xf32>, vector<16x16xf32>, vector<16x16xf32> -> vector<16x16xf32>
    %15 = vector.extract_strided_slice %0 {offsets = [1, 0], sizes = [1, 16], strides = [1, 1]} : vector<16x128xf32> to vector<1x16xf32>
    %16 = vector.shape_cast %15 : vector<1x16xf32> to vector<16xf32>
    %17 = vector.shape_cast %16 : vector<16xf32> to vector<1x16xf32>
    %18 = vector.broadcast %17 : vector<1x16xf32> to vector<16x16xf32>
    %19 = arith.addf %14, %18 : vector<16x16xf32>
    %cst_12 = arith.constant 0.000000e+00 : f32
    %20 = vector.broadcast %cst_12 : f32 to vector<16x16xf32>
    %21 = arith.maximumf %19, %20 : vector<16x16xf32>
    %c0_13 = arith.constant 0 : index
    %c0_14 = arith.constant 0 : index
    %22 = vector.load %arg3[%c0_13, %c0_14] : memref<1x8xf32, #tpu.memory_space<vmem>>, vector<1x8xf32>
    %c0_15 = arith.constant 0 : index
    %c0_16 = arith.constant 0 : index
    %23 = vector.load %arg9[%c0_15, %c0_16] : memref<8x16xf32, #tpu.memory_space<vmem>>, vector<8x16xf32>
    %cst_17 = arith.constant dense<0.000000e+00> : vector<1x16xf32>
    %24 = tpu.matmul %22, %23, %cst_17 {dimension_numbers = #tpu.dot_dimension_numbers<[1], [0], [0], [1], [0, 0, 1, 1], [], []>} : vector<1x8xf32>, vector<8x16xf32>, vector<1x16xf32> -> vector<1x16xf32>
    %25 = vector.extract_strided_slice %0 {offsets = [2, 0], sizes = [1, 16], strides = [1, 1]} : vector<16x128xf32> to vector<1x16xf32>
    %26 = vector.shape_cast %25 : vector<1x16xf32> to vector<16xf32>
    %27 = vector.shape_cast %26 : vector<16xf32> to vector<1x16xf32>
    %28 = arith.addf %24, %27 : vector<1x16xf32>
    %cst_18 = arith.constant 0.000000e+00 : f32
    %29 = vector.broadcast %cst_18 : f32 to vector<1x16xf32>
    %30 = arith.maximumf %28, %29 : vector<1x16xf32>
    %31 = vector.broadcast %30 : vector<1x16xf32> to vector<16x16xf32>
    %32 = arith.addf %21, %31 : vector<16x16xf32>
    %c0_19 = arith.constant 0 : index
    %c0_20 = arith.constant 0 : index
    %33 = vector.load %arg4[%c0_19, %c0_20] : memref<24x16xf32, #tpu.memory_space<vmem>>, vector<24x16xf32>
    %cst_21 = arith.constant dense<0.000000e+00> : vector<24x16xf32>
    %34 = tpu.matmul %33, %32, %cst_21 {dimension_numbers = #tpu.dot_dimension_numbers<[1], [0], [0], [1], [0, 0, 1, 1], [], []>} : vector<24x16xf32>, vector<16x16xf32>, vector<24x16xf32> -> vector<24x16xf32>
    %35 = vector.extract_strided_slice %34 {offsets = [0, 0], sizes = [8, 16], strides = [1, 1]} : vector<24x16xf32> to vector<8x16xf32>
    %36 = vector.extract_strided_slice %34 {offsets = [8, 0], sizes = [8, 16], strides = [1, 1]} : vector<24x16xf32> to vector<8x16xf32>
    %37 = arith.addf %36, %35 : vector<8x16xf32>
    %38 = vector.extract_strided_slice %34 {offsets = [16, 0], sizes = [8, 16], strides = [1, 1]} : vector<24x16xf32> to vector<8x16xf32>
    %39 = arith.subf %37, %38 : vector<8x16xf32>
    %c0_22 = arith.constant 0 : index
    %c0_23 = arith.constant 0 : index
    %40 = vector.load %arg10[%c0_22, %c0_23] : memref<16x48xf32, #tpu.memory_space<vmem>>, vector<16x48xf32>
    %cst_24 = arith.constant dense<0.000000e+00> : vector<8x48xf32>
    %41 = tpu.matmul %39, %40, %cst_24 {dimension_numbers = #tpu.dot_dimension_numbers<[1], [0], [0], [1], [0, 0, 1, 1], [], []>} : vector<8x16xf32>, vector<16x48xf32>, vector<8x48xf32> -> vector<8x48xf32>
    %42 = vector.extract_strided_slice %0 {offsets = [3, 0], sizes = [1, 48], strides = [1, 1]} : vector<16x128xf32> to vector<1x48xf32>
    %43 = vector.shape_cast %42 : vector<1x48xf32> to vector<48xf32>
    %44 = vector.shape_cast %43 : vector<48xf32> to vector<1x48xf32>
    %45 = vector.broadcast %44 : vector<1x48xf32> to vector<8x48xf32>
    %46 = arith.addf %41, %45 : vector<8x48xf32>
    %47 = vector.extract_strided_slice %46 {offsets = [0, 0], sizes = [8, 16], strides = [1, 1]} : vector<8x48xf32> to vector<8x16xf32>
    %48 = vector.extract_strided_slice %46 {offsets = [0, 16], sizes = [8, 16], strides = [1, 1]} : vector<8x48xf32> to vector<8x16xf32>
    %49 = vector.extract_strided_slice %46 {offsets = [0, 32], sizes = [8, 16], strides = [1, 1]} : vector<8x48xf32> to vector<8x16xf32>
    %c0_25 = arith.constant 0 : index
    %c0_26 = arith.constant 0 : index
    %50 = vector.load %arg5[%c0_25, %c0_26] : memref<16x8xf32, #tpu.memory_space<vmem>>, vector<16x8xf32>
    %c0_27 = arith.constant 0 : index
    %c0_28 = arith.constant 0 : index
    %51 = vector.load %arg6[%c0_27, %c0_28] : memref<16x8xf32, #tpu.memory_space<vmem>>, vector<16x8xf32>
    %c0_29 = arith.constant 0 : index
    %c0_30 = arith.constant 0 : index
    %52 = vector.load %arg11[%c0_29, %c0_30] : memref<16x4xf32, #tpu.memory_space<vmem>>, vector<16x4xf32>
    %cst_31 = arith.constant dense<0.000000e+00> : vector<16x16xf32>
    %53 = tpu.matmul %50, %47, %cst_31 {dimension_numbers = #tpu.dot_dimension_numbers<[1], [0], [0], [1], [0, 0, 1, 1], [], []>} : vector<16x8xf32>, vector<8x16xf32>, vector<16x16xf32> -> vector<16x16xf32>
    %cst_32 = arith.constant dense<0.000000e+00> : vector<16x16xf32>
    %54 = tpu.matmul %51, %48, %cst_32 {dimension_numbers = #tpu.dot_dimension_numbers<[1], [0], [0], [1], [0, 0, 1, 1], [], []>} : vector<16x8xf32>, vector<8x16xf32>, vector<16x16xf32> -> vector<16x16xf32>
    %cst_33 = arith.constant dense<0.000000e+00> : vector<16x16xf32>
    %55 = tpu.matmul %51, %49, %cst_33 {dimension_numbers = #tpu.dot_dimension_numbers<[1], [0], [0], [1], [0, 0, 1, 1], [], []>} : vector<16x8xf32>, vector<8x16xf32>, vector<16x16xf32> -> vector<16x16xf32>
    %56 = arith.mulf %53, %54 : vector<16x16xf32>
    %cst_34 = arith.constant dense<0.000000e+00> : vector<16x4xf32>
    %57 = tpu.matmul %56, %52, %cst_34 {dimension_numbers = #tpu.dot_dimension_numbers<[1], [0], [0], [1], [0, 0, 1, 1], [], []>} : vector<16x16xf32>, vector<16x4xf32>, vector<16x4xf32> -> vector<16x4xf32>
    %cst_35 = arith.constant dense<0xFF800000> : vector<4xf32>
    %58 = vector.multi_reduction <maximumf>, %57, %cst_35 [0] : vector<16x4xf32> to vector<4xf32>
    %59 = vector.shape_cast %58 : vector<4xf32> to vector<1x4xf32>
    %60 = vector.broadcast %59 : vector<1x4xf32> to vector<16x4xf32>
    %61 = arith.subf %57, %60 : vector<16x4xf32>
    %62 = math.exp %61 : vector<16x4xf32>
    %cst_36 = arith.constant dense<0.000000e+00> : vector<4xf32>
    %63 = vector.multi_reduction <add>, %62, %cst_36 [0] : vector<16x4xf32> to vector<4xf32>
    %64 = vector.shape_cast %63 : vector<4xf32> to vector<1x4xf32>
    %65 = tpu.reciprocal %64 {approx = true} : vector<1x4xf32> -> vector<1x4xf32>
    %66 = vector.broadcast %65 : vector<1x4xf32> to vector<16x4xf32>
    %67 = arith.mulf %62, %66 : vector<16x4xf32>
    %cst_37 = arith.constant dense<0.000000e+00> : vector<8x4xf32>
    %68 = tpu.matmul %50, %67, %cst_37 {dimension_numbers = #tpu.dot_dimension_numbers<[0], [0], [1], [1], [0, 1, 1, 1], [], []>} : vector<16x8xf32>, vector<16x4xf32>, vector<8x4xf32> -> vector<8x4xf32>
    %cst_38 = arith.constant dense<0.000000e+00> : vector<16x4xf32>
    %69 = tpu.matmul %50, %68, %cst_38 {dimension_numbers = #tpu.dot_dimension_numbers<[1], [0], [0], [1], [0, 0, 1, 1], [], []>} : vector<16x8xf32>, vector<8x4xf32>, vector<16x4xf32> -> vector<16x4xf32>
    %cst_39 = arith.constant dense<0.000000e+00> : vector<16x16xf32>
    %70 = tpu.matmul %69, %52, %cst_39 {dimension_numbers = #tpu.dot_dimension_numbers<[1], [1], [0], [0], [0, 0, 1, 0], [], []>} : vector<16x4xf32>, vector<16x4xf32>, vector<16x16xf32> -> vector<16x16xf32>
    %71 = arith.mulf %70, %55 : vector<16x16xf32>
    %cst_40 = arith.constant dense<0.000000e+00> : vector<8x16xf32>
    %72 = tpu.matmul %50, %71, %cst_40 {dimension_numbers = #tpu.dot_dimension_numbers<[0], [0], [1], [1], [0, 1, 1, 1], [], []>} : vector<16x8xf32>, vector<16x16xf32>, vector<8x16xf32> -> vector<8x16xf32>
    %73 = arith.addf %39, %72 : vector<8x16xf32>
    %74 = vector.extract_strided_slice %0 {offsets = [4, 0], sizes = [1, 16], strides = [1, 1]} : vector<16x128xf32> to vector<1x16xf32>
    %75 = vector.shape_cast %74 : vector<1x16xf32> to vector<16xf32>
    %76 = vector.extract_strided_slice %0 {offsets = [5, 0], sizes = [1, 16], strides = [1, 1]} : vector<16x128xf32> to vector<1x16xf32>
    %77 = vector.shape_cast %76 : vector<1x16xf32> to vector<16xf32>
    %cst_41 = arith.constant dense<0.000000e+00> : vector<8xf32>
    %78 = vector.multi_reduction <add>, %73, %cst_41 [1] : vector<8x16xf32> to vector<8xf32>
    %79 = vector.shape_cast %78 : vector<8xf32> to vector<8x1xf32>
    %cst_42 = arith.constant 1.600000e+01 : f32
    %80 = vector.broadcast %cst_42 : f32 to vector<8x1xf32>
    %81 = arith.divf %79, %80 : vector<8x1xf32>
    %82 = vector.broadcast %81 : vector<8x1xf32> to vector<8x16xf32>
    %83 = arith.subf %73, %82 : vector<8x16xf32>
    %84 = arith.mulf %83, %83 : vector<8x16xf32>
    %cst_43 = arith.constant dense<0.000000e+00> : vector<8xf32>
    %85 = vector.multi_reduction <add>, %84, %cst_43 [1] : vector<8x16xf32> to vector<8xf32>
    %86 = vector.shape_cast %85 : vector<8xf32> to vector<8x1xf32>
    %cst_44 = arith.constant 1.600000e+01 : f32
    %87 = vector.broadcast %cst_44 : f32 to vector<8x1xf32>
    %88 = arith.divf %86, %87 : vector<8x1xf32>
    %89 = vector.broadcast %81 : vector<8x1xf32> to vector<8x16xf32>
    %90 = arith.subf %73, %89 : vector<8x16xf32>
    %cst_45 = arith.constant 9.99999974E-6 : f32
    %91 = vector.broadcast %cst_45 : f32 to vector<8x1xf32>
    %92 = arith.addf %88, %91 : vector<8x1xf32>
    %93 = math.rsqrt %92 : vector<8x1xf32>
    %94 = vector.broadcast %93 : vector<8x1xf32> to vector<8x16xf32>
    %95 = arith.mulf %90, %94 : vector<8x16xf32>
    %96 = vector.shape_cast %75 : vector<16xf32> to vector<1x16xf32>
    %97 = vector.broadcast %96 : vector<1x16xf32> to vector<8x16xf32>
    %98 = arith.mulf %95, %97 : vector<8x16xf32>
    %99 = vector.shape_cast %77 : vector<16xf32> to vector<1x16xf32>
    %100 = vector.broadcast %99 : vector<1x16xf32> to vector<8x16xf32>
    %101 = arith.addf %98, %100 : vector<8x16xf32>
    %c0_46 = arith.constant 0 : index
    %c0_47 = arith.constant 0 : index
    %102 = vector.load %arg12[%c0_46, %c0_47] : memref<16x64xf32, #tpu.memory_space<vmem>>, vector<16x64xf32>
    %cst_48 = arith.constant dense<0.000000e+00> : vector<8x64xf32>
    %103 = tpu.matmul %101, %102, %cst_48 {dimension_numbers = #tpu.dot_dimension_numbers<[1], [0], [0], [1], [0, 0, 1, 1], [], []>} : vector<8x16xf32>, vector<16x64xf32>, vector<8x64xf32> -> vector<8x64xf32>
    %104 = vector.extract_strided_slice %0 {offsets = [8, 0], sizes = [1, 64], strides = [1, 1]} : vector<16x128xf32> to vector<1x64xf32>
    %105 = vector.shape_cast %104 : vector<1x64xf32> to vector<64xf32>
    %106 = vector.shape_cast %105 : vector<64xf32> to vector<1x64xf32>
    %107 = vector.broadcast %106 : vector<1x64xf32> to vector<8x64xf32>
    %108 = arith.addf %103, %107 : vector<8x64xf32>
    %cst_49 = arith.constant 0.000000e+00 : f32
    %109 = vector.broadcast %cst_49 : f32 to vector<8x64xf32>
    %110 = arith.maximumf %108, %109 : vector<8x64xf32>
    %c0_50 = arith.constant 0 : index
    %c0_51 = arith.constant 0 : index
    %111 = vector.load %arg13[%c0_50, %c0_51] : memref<64x16xf32, #tpu.memory_space<vmem>>, vector<64x16xf32>
    %cst_52 = arith.constant dense<0.000000e+00> : vector<8x16xf32>
    %112 = tpu.matmul %110, %111, %cst_52 {dimension_numbers = #tpu.dot_dimension_numbers<[1], [0], [0], [1], [0, 0, 1, 1], [], []>} : vector<8x64xf32>, vector<64x16xf32>, vector<8x16xf32> -> vector<8x16xf32>
    %113 = vector.extract_strided_slice %0 {offsets = [9, 0], sizes = [1, 16], strides = [1, 1]} : vector<16x128xf32> to vector<1x16xf32>
    %114 = vector.shape_cast %113 : vector<1x16xf32> to vector<16xf32>
    %115 = vector.shape_cast %114 : vector<16xf32> to vector<1x16xf32>
    %116 = vector.broadcast %115 : vector<1x16xf32> to vector<8x16xf32>
    %117 = arith.addf %112, %116 : vector<8x16xf32>
    %118 = arith.addf %101, %117 : vector<8x16xf32>
    %119 = vector.extract_strided_slice %0 {offsets = [6, 0], sizes = [1, 16], strides = [1, 1]} : vector<16x128xf32> to vector<1x16xf32>
    %120 = vector.shape_cast %119 : vector<1x16xf32> to vector<16xf32>
    %121 = vector.extract_strided_slice %0 {offsets = [7, 0], sizes = [1, 16], strides = [1, 1]} : vector<16x128xf32> to vector<1x16xf32>
    %122 = vector.shape_cast %121 : vector<1x16xf32> to vector<16xf32>
    %cst_53 = arith.constant dense<0.000000e+00> : vector<8xf32>
    %123 = vector.multi_reduction <add>, %118, %cst_53 [1] : vector<8x16xf32> to vector<8xf32>
    %124 = vector.shape_cast %123 : vector<8xf32> to vector<8x1xf32>
    %cst_54 = arith.constant 1.600000e+01 : f32
    %125 = vector.broadcast %cst_54 : f32 to vector<8x1xf32>
    %126 = arith.divf %124, %125 : vector<8x1xf32>
    %127 = vector.broadcast %126 : vector<8x1xf32> to vector<8x16xf32>
    %128 = arith.subf %118, %127 : vector<8x16xf32>
    %129 = arith.mulf %128, %128 : vector<8x16xf32>
    %cst_55 = arith.constant dense<0.000000e+00> : vector<8xf32>
    %130 = vector.multi_reduction <add>, %129, %cst_55 [1] : vector<8x16xf32> to vector<8xf32>
    %131 = vector.shape_cast %130 : vector<8xf32> to vector<8x1xf32>
    %cst_56 = arith.constant 1.600000e+01 : f32
    %132 = vector.broadcast %cst_56 : f32 to vector<8x1xf32>
    %133 = arith.divf %131, %132 : vector<8x1xf32>
    %134 = vector.broadcast %126 : vector<8x1xf32> to vector<8x16xf32>
    %135 = arith.subf %118, %134 : vector<8x16xf32>
    %cst_57 = arith.constant 9.99999974E-6 : f32
    %136 = vector.broadcast %cst_57 : f32 to vector<8x1xf32>
    %137 = arith.addf %133, %136 : vector<8x1xf32>
    %138 = math.rsqrt %137 : vector<8x1xf32>
    %139 = vector.broadcast %138 : vector<8x1xf32> to vector<8x16xf32>
    %140 = arith.mulf %135, %139 : vector<8x16xf32>
    %141 = vector.shape_cast %120 : vector<16xf32> to vector<1x16xf32>
    %142 = vector.broadcast %141 : vector<1x16xf32> to vector<8x16xf32>
    %143 = arith.mulf %140, %142 : vector<8x16xf32>
    %144 = vector.shape_cast %122 : vector<16xf32> to vector<1x16xf32>
    %145 = vector.broadcast %144 : vector<1x16xf32> to vector<8x16xf32>
    %146 = arith.addf %143, %145 : vector<8x16xf32>
    %c0_58 = arith.constant 0 : index
    %c0_59 = arith.constant 0 : index
    %147 = vector.load %arg14[%c0_58, %c0_59] : memref<16x8xf32, #tpu.memory_space<vmem>>, vector<16x8xf32>
    %cst_60 = arith.constant dense<0.000000e+00> : vector<8x8xf32>
    %148 = tpu.matmul %146, %147, %cst_60 {dimension_numbers = #tpu.dot_dimension_numbers<[1], [0], [0], [1], [0, 0, 1, 1], [], []>} : vector<8x16xf32>, vector<16x8xf32>, vector<8x8xf32> -> vector<8x8xf32>
    %149 = vector.extract_strided_slice %0 {offsets = [10, 0], sizes = [1, 8], strides = [1, 1]} : vector<16x128xf32> to vector<1x8xf32>
    %150 = vector.shape_cast %149 : vector<1x8xf32> to vector<8xf32>
    %151 = vector.shape_cast %150 : vector<8xf32> to vector<1x8xf32>
    %152 = vector.broadcast %151 : vector<1x8xf32> to vector<8x8xf32>
    %153 = arith.addf %148, %152 : vector<8x8xf32>
    %cst_61 = arith.constant 0.000000e+00 : f32
    %154 = vector.broadcast %cst_61 : f32 to vector<8x8xf32>
    %155 = arith.maximumf %153, %154 : vector<8x8xf32>
    %c0_62 = arith.constant 0 : index
    %c0_63 = arith.constant 0 : index
    %156 = vector.load %arg15[%c0_62, %c0_63] : memref<8x1xf32, #tpu.memory_space<vmem>>, vector<8x1xf32>
    %cst_64 = arith.constant dense<0.000000e+00> : vector<8x1xf32>
    %157 = tpu.matmul %155, %156, %cst_64 {dimension_numbers = #tpu.dot_dimension_numbers<[1], [0], [0], [1], [0, 0, 1, 1], [], []>} : vector<8x8xf32>, vector<8x1xf32>, vector<8x1xf32> -> vector<8x1xf32>
    %158 = vector.extract_strided_slice %0 {offsets = [11, 0], sizes = [1, 1], strides = [1, 1]} : vector<16x128xf32> to vector<1x1xf32>
    %159 = vector.shape_cast %158 : vector<1x1xf32> to vector<1xf32>
    %160 = vector.shape_cast %159 : vector<1xf32> to vector<1x1xf32>
    %161 = vector.broadcast %160 : vector<1x1xf32> to vector<8x1xf32>
    %162 = arith.addf %157, %161 : vector<8x1xf32>
    %cst_65 = arith.constant 0.000000e+00 : f32
    %163 = vector.broadcast %cst_65 : f32 to vector<8x111xf32>
    %164 = tpu.concatenate %146, %162, %163 in 1 : vector<8x16xf32>, vector<8x1xf32>, vector<8x111xf32> -> vector<8x128xf32>
    %c0_66 = arith.constant 0 : index
    %c0_67 = arith.constant 0 : index
    %165 = vector.load %arg17[%c0_66, %c0_67] : memref<8x128xf32, #tpu.memory_space<vmem>>, vector<8x128xf32>
    tpu.vector_store %arg17[%c0_66, %c0_67], %164 {strides = array<i32>} : memref<8x128xf32, #tpu.memory_space<vmem>>, vector<8x128xf32>,
    return
  }
  func.func @transform_0(%arg0: i32) -> (i32, i32) {
    %c0_i32 = arith.constant 0 : i32
    %c0_i32_0 = arith.constant 0 : i32
    %c0_i32_1 = arith.constant 0 : i32
    return %c0_i32, %c0_i32_0 : i32, i32
  }
  func.func @transform_1(%arg0: i32) -> (i32, i32) {
    %c0_i32 = arith.constant 0 : i32
    %c0_i32_0 = arith.constant 0 : i32
    %c0_i32_1 = arith.constant 0 : i32
    return %c0_i32, %c0_i32_0 : i32, i32
  }
  func.func @transform_2(%arg0: i32) -> (i32, i32) {
    %c0_i32 = arith.constant 0 : i32
    %c0_i32_0 = arith.constant 0 : i32
    %c0_i32_1 = arith.constant 0 : i32
    return %c0_i32, %c0_i32_0 : i32, i32
  }
  func.func @transform_3(%arg0: i32) -> (i32, i32) {
    %c0_i32 = arith.constant 0 : i32
    %c0_i32_0 = arith.constant 0 : i32
    %c0_i32_1 = arith.constant 0 : i32
    return %c0_i32, %c0_i32_0 : i32, i32
  }
  func.func @transform_4(%arg0: i32) -> (i32, i32) {
    %c0_i32 = arith.constant 0 : i32
    %c0_i32_0 = arith.constant 0 : i32
    %c0_i32_1 = arith.constant 0 : i32
    return %c0_i32, %c0_i32_0 : i32, i32
  }
  func.func @transform_5(%arg0: i32) -> (i32, i32) {
    %c0_i32 = arith.constant 0 : i32
    %c0_i32_0 = arith.constant 0 : i32
    %c0_i32_1 = arith.constant 0 : i32
    return %c0_i32, %c0_i32_0 : i32, i32
  }
  func.func @transform_6(%arg0: i32) -> (i32, i32) {
    %c0_i32 = arith.constant 0 : i32
    %c0_i32_0 = arith.constant 0 : i32
    %c0_i32_1 = arith.constant 0 : i32
    return %c0_i32, %c0_i32_0 : i32, i32
  }
  func.func @transform_7(%arg0: i32) -> (i32, i32) {
    %c0_i32 = arith.constant 0 : i32
    %c0_i32_0 = arith.constant 0 : i32
    %c0_i32_1 = arith.constant 0 : i32
    return %c0_i32, %c0_i32_0 : i32, i32
  }
  func.func @transform_8(%arg0: i32) -> (i32, i32) {
    %c0_i32 = arith.constant 0 : i32
    %c0_i32_0 = arith.constant 0 : i32
    %c0_i32_1 = arith.constant 0 : i32
    return %c0_i32, %c0_i32_0 : i32, i32
  }
  func.func @transform_9(%arg0: i32) -> (i32, i32) {
    %c0_i32 = arith.constant 0 : i32
    %c0_i32_0 = arith.constant 0 : i32
    %c0_i32_1 = arith.constant 0 : i32
    return %c0_i32, %c0_i32_0 : i32, i32
  }
  func.func @transform_10(%arg0: i32) -> (i32, i32) {
    %c0_i32 = arith.constant 0 : i32
    %c0_i32_0 = arith.constant 0 : i32
    %c0_i32_1 = arith.constant 0 : i32
    return %c0_i32, %c0_i32_0 : i32, i32
  }
  func.func @transform_11(%arg0: i32) -> (i32, i32) {
    %c0_i32 = arith.constant 0 : i32
    %c0_i32_0 = arith.constant 0 : i32
    %c0_i32_1 = arith.constant 0 : i32
    return %c0_i32, %c0_i32_0 : i32, i32
  }
  func.func @transform_12(%arg0: i32) -> (i32, i32) {
    %c0_i32 = arith.constant 0 : i32
    %c0_i32_0 = arith.constant 0 : i32
    %c0_i32_1 = arith.constant 0 : i32
    return %c0_i32, %c0_i32_0 : i32, i32
  }
  func.func @transform_13(%arg0: i32) -> (i32, i32) {
    %c0_i32 = arith.constant 0 : i32
    %c0_i32_0 = arith.constant 0 : i32
    %c0_i32_1 = arith.constant 0 : i32
    return %c0_i32, %c0_i32_0 : i32, i32
  }
  func.func @transform_14(%arg0: i32) -> (i32, i32) {
    %c0_i32 = arith.constant 0 : i32
    %c0_i32_0 = arith.constant 0 : i32
    %c0_i32_1 = arith.constant 0 : i32
    return %c0_i32, %c0_i32_0 : i32, i32
  }
  func.func @transform_15(%arg0: i32) -> (i32, i32) {
    %c0_i32 = arith.constant 0 : i32
    %c0_i32_0 = arith.constant 0 : i32
    %c0_i32_1 = arith.constant 0 : i32
    return %c0_i32, %c0_i32_0 : i32, i32
  }
  func.func @transform_16(%arg0: i32) -> (i32, i32) {
    %c0_i32 = arith.constant 0 : i32
    %c0_i32_0 = arith.constant 0 : i32
    %c0_i32_1 = arith.constant 0 : i32
    return %c0_i32, %c0_i32_0 : i32, i32
  }
}

</mosaic_0001>

<llo_original>
// kernel: tpu_custom_call.1
$region0: #{tpu_custom_call.1}
  #allocation0 [shape = 'u32[]', space=smem, size = 0x4, offset = 0x4, fixed_abs, tag = 'smem constant byte address 0x4 - core index']
  #allocation1 [shape = 'u32[144,128]{1,0:T(1,128)}', space=vmem, size = 0x12000, scoped, tag = 'internal scratch']
  %s0 = inlined_call_operand.vmem [shape: f32[16,16], index: 0, kind: input, shape index: {}]
  %s1 = inlined_call_operand.vmem [shape: f32[16,8], index: 1, kind: input, shape index: {}]
  %s2 = inlined_call_operand.vmem [shape: f32[1,8], index: 2, kind: input, shape index: {}]
  %s3 = inlined_call_operand.vmem [shape: f32[24,16], index: 3, kind: input, shape index: {}]
  %s4 = inlined_call_operand.vmem [shape: f32[16,8], index: 4, kind: input, shape index: {}]
  %s5 = inlined_call_operand.vmem [shape: f32[16,8], index: 5, kind: input, shape index: {}]
  %s6 = inlined_call_operand.vmem [shape: f32[8,16], index: 6, kind: input, shape index: {}]
  %s7 = inlined_call_operand.vmem [shape: f32[16,16], index: 7, kind: input, shape index: {}]
  %s8 = inlined_call_operand.vmem [shape: f32[8,16], index: 8, kind: input, shape index: {}]
  %s9 = inlined_call_operand.vmem [shape: f32[16,48], index: 9, kind: input, shape index: {}]
  %s10 = inlined_call_operand.vmem [shape: f32[16,4], index: 10, kind: input, shape index: {}]
  %s11 = inlined_call_operand.vmem [shape: f32[16,64], index: 11, kind: input, shape index: {}]
  %s12 = inlined_call_operand.vmem [shape: f32[64,16], index: 12, kind: input, shape index: {}]
  %s13 = inlined_call_operand.vmem [shape: f32[16,8], index: 13, kind: input, shape index: {}]
  %s14 = inlined_call_operand.vmem [shape: f32[8,1], index: 14, kind: input, shape index: {}]
  %s15 = inlined_call_operand.vmem [shape: f32[16,128], index: 15, kind: input, shape index: {}]
  %s16 = inlined_call_operand.hbm [shape: f32[8,128], index: 16, kind: output, shape index: {}]
  %s17 = sld [smem:[#allocation0]]
  $region74: #{tpu_custom_call.1} parent=0
    _
  %s19 = ssub.s32 1, %s17
  %s20 = scalar_select 0, %s19, %s17
  $region1: #{tpu_custom_call.1} parent=0
    #allocation2 [shape = 'u8[4096]{0}', space=vmem, size = 0x1000, scoped, tag = 'output window, operand 0, single buffered']
    #allocation3 [shape = 's32[1]{0}', space=sflag, size = 0x4, scoped, tag = 'scoped memory for tpu_custom_call.1']
    %21 = vsyncpa [#allocation3], 0
    // Predicated region
    $region2: #{tpu_custom_call.1} parent=1 // pred_check
      _
    $region3: #{tpu_custom_call.1} parent=1 // pred_check_branch
      %23 = sbr.rel (0) target = $region5
    $region4: #{tpu_custom_call.1} parent=1 // pred_region
      _
    $region5: #{tpu_custom_call.1} parent=1 // pred_fallthru
      _
    // Predicated region
    $region6: #{tpu_custom_call.1} parent=1 // pred_check
      _
    $region7: #{tpu_custom_call.1} parent=1 // pred_check_branch
      %25 = sbr.rel (0) target = $region9
    $region8: #{tpu_custom_call.1} parent=1 // pred_region
      _
    $region9: #{tpu_custom_call.1} parent=1 // pred_fallthru
      _
    // Predicated region
    $region10: #{tpu_custom_call.1} parent=1 // pred_check
      _
    $region11: #{tpu_custom_call.1} parent=1 // pred_check_branch
      %27 = sbr.rel (0) target = $region13
    $region12: #{tpu_custom_call.1} parent=1 // pred_region
      _
    $region13: #{tpu_custom_call.1} parent=1 // pred_fallthru
      _
    // Predicated region
    $region14: #{tpu_custom_call.1} parent=1 // pred_check
      _
    $region15: #{tpu_custom_call.1} parent=1 // pred_check_branch
      %29 = sbr.rel (0) target = $region17
    $region16: #{tpu_custom_call.1} parent=1 // pred_region
      _
    $region17: #{tpu_custom_call.1} parent=1 // pred_fallthru
      _
    // Predicated region
    $region18: #{tpu_custom_call.1} parent=1 // pred_check
      _
    $region19: #{tpu_custom_call.1} parent=1 // pred_check_branch
      %31 = sbr.rel (0) target = $region21
    $region20: #{tpu_custom_call.1} parent=1 // pred_region
      _
    $region21: #{tpu_custom_call.1} parent=1 // pred_fallthru
      _
    // Predicated region
    $region22: #{tpu_custom_call.1} parent=1 // pred_check
      _
    $region23: #{tpu_custom_call.1} parent=1 // pred_check_branch
      %33 = sbr.rel (0) target = $region25
    $region24: #{tpu_custom_call.1} parent=1 // pred_region
      _
    $region25: #{tpu_custom_call.1} parent=1 // pred_fallthru
      _
    // Predicated region
    $region26: #{tpu_custom_call.1} parent=1 // pred_check
      _
    $region27: #{tpu_custom_call.1} parent=1 // pred_check_branch
      %35 = sbr.rel (0) target = $region29
    $region28: #{tpu_custom_call.1} parent=1 // pred_region
      _
    $region29: #{tpu_custom_call.1} parent=1 // pred_fallthru
      _
    // Predicated region
    $region30: #{tpu_custom_call.1} parent=1 // pred_check
      _
    $region31: #{tpu_custom_call.1} parent=1 // pred_check_branch
      %37 = sbr.rel (0) target = $region33
    $region32: #{tpu_custom_call.1} parent=1 // pred_region
      _
    $region33: #{tpu_custom_call.1} parent=1 // pred_fallthru
      _
    // Predicated region
    $region34: #{tpu_custom_call.1} parent=1 // pred_check
      _
    $region35: #{tpu_custom_call.1} parent=1 // pred_check_branch
      %39 = sbr.rel (0) target = $region37
    $region36: #{tpu_custom_call.1} parent=1 // pred_region
      _
    $region37: #{tpu_custom_call.1} parent=1 // pred_fallthru
      _
    // Predicated region
    $region38: #{tpu_custom_call.1} parent=1 // pred_check
      _
    $region39: #{tpu_custom_call.1} parent=1 // pred_check_branch
      %41 = sbr.rel (0) target = $region41
    $region40: #{tpu_custom_call.1} parent=1 // pred_region
      _
    $region41: #{tpu_custom_call.1} parent=1 // pred_fallthru
      _
    // Predicated region
    $region42: #{tpu_custom_call.1} parent=1 // pred_check
      _
    $region43: #{tpu_custom_call.1} parent=1 // pred_check_branch
      %43 = sbr.rel (0) target = $region45
    $region44: #{tpu_custom_call.1} parent=1 // pred_region
      _
    $region45: #{tpu_custom_call.1} parent=1 // pred_fallthru
      _
    // Predicated region
    $region46: #{tpu_custom_call.1} parent=1 // pred_check
      _
    $region47: #{tpu_custom_call.1} parent=1 // pred_check_branch
      %45 = sbr.rel (0) target = $region49
    $region48: #{tpu_custom_call.1} parent=1 // pred_region
      _
    $region49: #{tpu_custom_call.1} parent=1 // pred_fallthru
      _
    // Predicated region
    $region50: #{tpu_custom_call.1} parent=1 // pred_check
      _
    $region51: #{tpu_custom_call.1} parent=1 // pred_check_branch
      %47 = sbr.rel (0) target = $region53
    $region52: #{tpu_custom_call.1} parent=1 // pred_region
      _
    $region53: #{tpu_custom_call.1} parent=1 // pred_fallthru
      _
    // Predicated region
    $region54: #{tpu_custom_call.1} parent=1 // pred_check
      _
    $region55: #{tpu_custom_call.1} parent=1 // pred_check_branch
      %49 = sbr.rel (0) target = $region57
    $region56: #{tpu_custom_call.1} parent=1 // pred_region
      _
    $region57: #{tpu_custom_call.1} parent=1 // pred_fallthru
      _
    // Predicated region
    $region58: #{tpu_custom_call.1} parent=1 // pred_check
      _
    $region59: #{tpu_custom_call.1} parent=1 // pred_check_branch
      %51 = sbr.rel (0) target = $region61
    $region60: #{tpu_custom_call.1} parent=1 // pred_region
      _
    $region61: #{tpu_custom_call.1} parent=1 // pred_fallthru
      _
    // Predicated region
    $region62: #{tpu_custom_call.1} parent=1 // pred_check
      _
    $region63: #{tpu_custom_call.1} parent=1 // pred_check_branch
      %53 = sbr.rel (0) target = $region65
    $region64: #{tpu_custom_call.1} parent=1 // pred_region
      _
    $region65: #{tpu_custom_call.1} parent=1 // pred_fallthru
      _
    %v54 = vld [vmem:[%s15] sm:$0xff]
    %v55 = vld [vmem:[%s15 + $0x8] sm:$0xff]
    %v56 = vld [vmem:[%s0] sm:$0xff]
    %v57 = vld [vmem:[%s0 + $0x8] sm:$0xff]
    %v58 = vld [vmem:[%s1] sm:$0xff]
    %v59 = vld [vmem:[%s1 + $0x8] sm:$0xff]
    %v60 = vld [vmem:[%s6] sm:$0xff]
    %vm61 = vcmask 64512
    %v63 = vsel %vm61, %v58, 0
    %v66 = vsel %vm61, %v59, 0
    %68 = vmatprep.subr.mxu0 0.0
    %69 = vmatpush1.msra.mxu0 %v60
    %70 = vmatprep.subr.mxu0 0.0
    %71 = vmatpush1.msra.mxu0 0.0
    %72 = vmatprep.subr.mxu0 0.0
    %73 = vmatpush1.msra.mxu0 0.0
    %74 = vmatprep.subr.mxu0 0.0
    %75 = vmatpush1.msra.mxu0 0.0
    %76 = vmatprep.subr.mxu0 0.0
    %77 = vmatpush1.msra.mxu0 0.0
    %78 = vmatprep.subr.mxu0 0.0
    %79 = vmatpush1.msra.mxu0 0.0
    %80 = vmatprep.subr.mxu0 0.0
    %81 = vmatpush1.msra.mxu0 0.0
    %82 = vmatprep.subr.mxu0 0.0
    %83 = vmatpush1.msra.mxu0 0.0
    %84 = vmatprep.subr.mxu0 0.0
    %85 = vmatpush1.msra.mxu0 0.0
    %86 = vmatprep.subr.mxu0 0.0
    %87 = vmatpush1.msra.mxu0 0.0
    %88 = vmatprep.subr.mxu0 0.0
    %89 = vmatpush1.msra.mxu0 0.0
    %90 = vmatprep.subr.mxu0 0.0
    %91 = vmatpush1.msra.mxu0 0.0
    %92 = vmatprep.subr.mxu0 0.0
    %93 = vmatpush1.msra.mxu0 0.0
    %94 = vmatprep.subr.mxu0 0.0
    %95 = vmatpush1.msra.mxu0 0.0
    %96 = vmatprep.subr.mxu0 0.0
    %97 = vmatpush1.msra.mxu0 0.0
    %98 = vmatprep.subr.mxu0 0.0
    %99 = vmatpush1.msra.mxu0 0.0
    %100 = vmatprep.subr.mxu0 0.0
    %101 = vmatpush1.msra.mxu0 0.0
    %102 = vmatprep.subr.mxu0 0.0
    %103 = vmatpush1.msra.mxu0 0.0
    %104 = vmatprep.subr.mxu0 0.0
    %105 = vmatpush1.msra.mxu0 0.0
    %106 = vmatprep.subr.mxu0 0.0
    %107 = vmatpush1.msra.mxu0 0.0
    %108 = vmatprep.subr.mxu0 0.0
    %109 = vmatpush1.msra.mxu0 0.0
    %110 = vmatprep.subr.mxu0 0.0
    %111 = vmatpush1.msra.mxu0 0.0
    %112 = vmatprep.subr.mxu0 0.0
    %113 = vmatpush1.msra.mxu0 0.0
    %114 = vmatprep.subr.mxu0 0.0
    %115 = vmatpush1.msra.mxu0 0.0
    %116 = vmatprep.subr.mxu0 0.0
    %117 = vmatpush1.msra.mxu0 0.0
    %118 = vmatprep.subr.mxu0 0.0
    %119 = vmatpush1.msra.mxu0 0.0
    %120 = vmatprep.subr.mxu0 0.0
    %121 = vmatpush1.msra.mxu0 0.0
    %122 = vmatprep.subr.mxu0 0.0
    %123 = vmatpush1.msra.mxu0 0.0
    %124 = vmatprep.subr.mxu0 0.0
    %125 = vmatpush1.msra.mxu0 0.0
    %126 = vmatprep.subr.mxu0 0.0
    %127 = vmatpush1.msra.mxu0 0.0
    %128 = vmatprep.subr.mxu0 0.0
    %129 = vmatpush1.msra.mxu0 0.0
    %130 = vmatprep.subr.mxu0 0.0
    %131 = vmatpush1.msra.mxu0 0.0
    %132 = vmatprep.mubr.f32.mxu0 0.0
    %133 = vmatmul.mubr.f32.gmra.mrb[0].mxu0 %v63
    %v134 = vpop.f32.mrb[0].mxu0
    %v135 = vadd.f32 0.0, %v134
    %v136 = vpop.f32.mrb[0].mxu0
    %137 = vmatprep.mubr.f32.mxu0 0.0
    %138 = vmatmul.mubr.f32.gmra.mrb[0].mxu0 %v66
    %v139 = vpop.f32.mrb[0].mxu0
    %v140 = vadd.f32 0.0, %v139
    %v141 = vpop.f32.mrb[0].mxu0
    %142 = vdwg.mxu0
    %v143 = vlaneseq
    %v144 = vshrl.u32 %v143, 7
    %v145 = vsub.s32 0, %v144
    %v146 = vrot.slane %v54, %v145
    %vm147 = vcmask 130048
    %v149 = vsel %vm147, %v56, 0
    %v152 = vsel %vm147, %v57, 0
    %154 = vmatprep.subr.mxu0 0.0
    %155 = vmatpush1.msra.mxu0 %v135
    %156 = vmatprep.subr.mxu0 0.0
    %157 = vmatpush1.msra.mxu0 %v140
    %158 = vmatprep.subr.mxu0 0.0
    %159 = vmatpush1.msra.mxu0 0.0
    %160 = vmatprep.subr.mxu0 0.0
    %161 = vmatpush1.msra.mxu0 0.0
    %162 = vmatprep.subr.mxu0 0.0
    %163 = vmatpush1.msra.mxu0 0.0
    %164 = vmatprep.subr.mxu0 0.0
    %165 = vmatpush1.msra.mxu0 0.0
    %166 = vmatprep.subr.mxu0 0.0
    %167 = vmatpush1.msra.mxu0 0.0
    %168 = vmatprep.subr.mxu0 0.0
    %169 = vmatpush1.msra.mxu0 0.0
    %170 = vmatprep.subr.mxu0 0.0
    %171 = vmatpush1.msra.mxu0 0.0
    %172 = vmatprep.subr.mxu0 0.0
    %173 = vmatpush1.msra.mxu0 0.0
    %174 = vmatprep.subr.mxu0 0.0
    %175 = vmatpush1.msra.mxu0 0.0
    %176 = vmatprep.subr.mxu0 0.0
    %177 = vmatpush1.msra.mxu0 0.0
    %178 = vmatprep.subr.mxu0 0.0
    %179 = vmatpush1.msra.mxu0 0.0
    %180 = vmatprep.subr.mxu0 0.0
    %181 = vmatpush1.msra.mxu0 0.0
    %182 = vmatprep.subr.mxu0 0.0
    %183 = vmatpush1.msra.mxu0 0.0
    %184 = vmatprep.subr.mxu0 0.0
    %185 = vmatpush1.msra.mxu0 0.0
    %186 = vmatprep.subr.mxu0 0.0
    %187 = vmatpush1.msra.mxu0 0.0
    %188 = vmatprep.subr.mxu0 0.0
    %189 = vmatpush1.msra.mxu0 0.0
    %190 = vmatprep.subr.mxu0 0.0
    %191 = vmatpush1.msra.mxu0 0.0
    %192 = vmatprep.subr.mxu0 0.0
    %193 = vmatpush1.msra.mxu0 0.0
    %194 = vmatprep.subr.mxu0 0.0
    %195 = vmatpush1.msra.mxu0 0.0
    %196 = vmatprep.subr.mxu0 0.0
    %197 = vmatpush1.msra.mxu0 0.0
    %198 = vmatprep.subr.mxu0 0.0
    %199 = vmatpush1.msra.mxu0 0.0
    %200 = vmatprep.subr.mxu0 0.0
    %201 = vmatpush1.msra.mxu0 0.0
    %202 = vmatprep.subr.mxu0 0.0
    %203 = vmatpush1.msra.mxu0 0.0
    %204 = vmatprep.subr.mxu0 0.0
    %205 = vmatpush1.msra.mxu0 0.0
    %206 = vmatprep.subr.mxu0 0.0
    %207 = vmatpush1.msra.mxu0 0.0
    %208 = vmatprep.subr.mxu0 0.0
    %209 = vmatpush1.msra.mxu0 0.0
    %210 = vmatprep.subr.mxu0 0.0
    %211 = vmatpush1.msra.mxu0 0.0
    %212 = vmatprep.subr.mxu0 0.0
    %213 = vmatpush1.msra.mxu0 0.0
    %214 = vmatprep.subr.mxu0 0.0
    %215 = vmatpush1.msra.mxu0 0.0
    %216 = vmatprep.subr.mxu0 0.0
    %217 = vmatpush1.msra.mxu0 0.0
    %218 = vmatprep.mubr.f32.mxu0 0.0
    %219 = vmatmul.mubr.f32.gmra.mrb[0].mxu0 %v149
    %v220 = vpop.f32.mrb[0].mxu0
    %v221 = vadd.f32 %v146, %v220
    %v222 = vpop.f32.mrb[0].mxu0
    %223 = vmatprep.mubr.f32.mxu0 0.0
    %224 = vmatmul.mubr.f32.gmra.mrb[0].mxu0 %v152
    %v225 = vpop.f32.mrb[0].mxu0
    %v226 = vadd.f32 %v146, %v225
    %v227 = vpop.f32.mrb[0].mxu0
    %228 = vdwg.mxu0
    %v229 = vmax.f32 %v221, 0.0
    %v230 = vmax.f32 %v226, 0.0
    %v231 = vld [vmem:[%s7] sm:$0xff]
    %v232 = vld [vmem:[%s7 + $0x8] sm:$0xff]
    %v233 = vlaneseq
    %v234 = vshrl.u32 %v233, 7
    %v235 = vsub.s32 1, %v234
    %v236 = vrot.slane %v54, %v235
    %v238 = vsel %vm147, %v229, 0
    %v241 = vsel %vm147, %v230, 0
    %243 = vmatprep.subr.mxu0 0.0
    %244 = vmatpush1.msra.mxu0 %v231
    %245 = vmatprep.subr.mxu0 0.0
    %246 = vmatpush1.msra.mxu0 %v232
    %247 = vmatprep.subr.mxu0 0.0
    %248 = vmatpush1.msra.mxu0 0.0
    %249 = vmatprep.subr.mxu0 0.0
    %250 = vmatpush1.msra.mxu0 0.0
    %251 = vmatprep.subr.mxu0 0.0
    %252 = vmatpush1.msra.mxu0 0.0
    %253 = vmatprep.subr.mxu0 0.0
    %254 = vmatpush1.msra.mxu0 0.0
    %255 = vmatprep.subr.mxu0 0.0
    %256 = vmatpush1.msra.mxu0 0.0
    %257 = vmatprep.subr.mxu0 0.0
    %258 = vmatpush1.msra.mxu0 0.0
    %259 = vmatprep.subr.mxu0 0.0
    %260 = vmatpush1.msra.mxu0 0.0
    %261 = vmatprep.subr.mxu0 0.0
    %262 = vmatpush1.msra.mxu0 0.0
    %263 = vmatprep.subr.mxu0 0.0
    %264 = vmatpush1.msra.mxu0 0.0
    %265 = vmatprep.subr.mxu0 0.0
    %266 = vmatpush1.msra.mxu0 0.0
    %267 = vmatprep.subr.mxu0 0.0
    %268 = vmatpush1.msra.mxu0 0.0
    %269 = vmatprep.subr.mxu0 0.0
    %270 = vmatpush1.msra.mxu0 0.0
    %271 = vmatprep.subr.mxu0 0.0
    %272 = vmatpush1.msra.mxu0 0.0
    %273 = vmatprep.subr.mxu0 0.0
    %274 = vmatpush1.msra.mxu0 0.0
    %275 = vmatprep.subr.mxu0 0.0
    %276 = vmatpush1.msra.mxu0 0.0
    %277 = vmatprep.subr.mxu0 0.0
    %278 = vmatpush1.msra.mxu0 0.0
    %279 = vmatprep.subr.mxu0 0.0
    %280 = vmatpush1.msra.mxu0 0.0
    %281 = vmatprep.subr.mxu0 0.0
    %282 = vmatpush1.msra.mxu0 0.0
    %283 = vmatprep.subr.mxu0 0.0
    %284 = vmatpush1.msra.mxu0 0.0
    %285 = vmatprep.subr.mxu0 0.0
    %286 = vmatpush1.msra.mxu0 0.0
    %287 = vmatprep.subr.mxu0 0.0
    %288 = vmatpush1.msra.mxu0 0.0
    %289 = vmatprep.subr.mxu0 0.0
    %290 = vmatpush1.msra.mxu0 0.0
    %291 = vmatprep.subr.mxu0 0.0
    %292 = vmatpush1.msra.mxu0 0.0
    %293 = vmatprep.subr.mxu0 0.0
    %294 = vmatpush1.msra.mxu0 0.0
    %295 = vmatprep.subr.mxu0 0.0
    %296 = vmatpush1.msra.mxu0 0.0
    %297 = vmatprep.subr.mxu0 0.0
    %298 = vmatpush1.msra.mxu0 0.0
    %299 = vmatprep.subr.mxu0 0.0
    %300 = vmatpush1.msra.mxu0 0.0
    %301 = vmatprep.subr.mxu0 0.0
    %302 = vmatpush1.msra.mxu0 0.0
    %303 = vmatprep.subr.mxu0 0.0
    %304 = vmatpush1.msra.mxu0 0.0
    %305 = vmatprep.subr.mxu0 0.0
    %306 = vmatpush1.msra.mxu0 0.0
    %307 = vmatprep.mubr.f32.mxu0 0.0
    %308 = vmatmul.mubr.f32.gmra.mrb[0].mxu0 %v238
    %v309 = vpop.f32.mrb[0].mxu0
    %v310 = vadd.f32 %v236, %v309
    %v311 = vpop.f32.mrb[0].mxu0
    %312 = vmatprep.mubr.f32.mxu0 0.0
    %313 = vmatmul.mubr.f32.gmra.mrb[0].mxu0 %v241
    %v314 = vpop.f32.mrb[0].mxu0
    %v315 = vadd.f32 %v236, %v314
    %v316 = vpop.f32.mrb[0].mxu0
    %317 = vdwg.mxu0
    %v318 = vmax.f32 %v310, 0.0
    %v319 = vmax.f32 %v315, 0.0
    %v320 = vld [vmem:[%s2] sm:$0x1]
    %v321 = vld [vmem:[%s8] sm:$0xff]
    %v323 = vrot.slane %v54, 2
    %v326 = vsel %vm61, %v320, 0
    %328 = vmatprep.subr.mxu0 0.0
    %329 = vmatpush1.msra.mxu0 %v321
    %330 = vmatprep.subr.mxu0 0.0
    %331 = vmatpush1.msra.mxu0 0.0
    %332 = vmatprep.subr.mxu0 0.0
    %333 = vmatpush1.msra.mxu0 0.0
    %334 = vmatprep.subr.mxu0 0.0
    %335 = vmatpush1.msra.mxu0 0.0
    %336 = vmatprep.subr.mxu0 0.0
    %337 = vmatpush1.msra.mxu0 0.0
    %338 = vmatprep.subr.mxu0 0.0
    %339 = vmatpush1.msra.mxu0 0.0
    %340 = vmatprep.subr.mxu0 0.0
    %341 = vmatpush1.msra.mxu0 0.0
    %342 = vmatprep.subr.mxu0 0.0
    %343 = vmatpush1.msra.mxu0 0.0
    %344 = vmatprep.subr.mxu0 0.0
    %345 = vmatpush1.msra.mxu0 0.0
    %346 = vmatprep.subr.mxu0 0.0
    %347 = vmatpush1.msra.mxu0 0.0
    %348 = vmatprep.subr.mxu0 0.0
    %349 = vmatpush1.msra.mxu0 0.0
    %350 = vmatprep.subr.mxu0 0.0
    %351 = vmatpush1.msra.mxu0 0.0
    %352 = vmatprep.subr.mxu0 0.0
    %353 = vmatpush1.msra.mxu0 0.0
    %354 = vmatprep.subr.mxu0 0.0
    %355 = vmatpush1.msra.mxu0 0.0
    %356 = vmatprep.subr.mxu0 0.0
    %357 = vmatpush1.msra.mxu0 0.0
    %358 = vmatprep.subr.mxu0 0.0
    %359 = vmatpush1.msra.mxu0 0.0
    %360 = vmatprep.subr.mxu0 0.0
    %361 = vmatpush1.msra.mxu0 0.0
    %362 = vmatprep.subr.mxu0 0.0
    %363 = vmatpush1.msra.mxu0 0.0
    %364 = vmatprep.subr.mxu0 0.0
    %365 = vmatpush1.msra.mxu0 0.0
    %366 = vmatprep.subr.mxu0 0.0
    %367 = vmatpush1.msra.mxu0 0.0
    %368 = vmatprep.subr.mxu0 0.0
    %369 = vmatpush1.msra.mxu0 0.0
    %370 = vmatprep.subr.mxu0 0.0
    %371 = vmatpush1.msra.mxu0 0.0
    %372 = vmatprep.subr.mxu0 0.0
    %373 = vmatpush1.msra.mxu0 0.0
    %374 = vmatprep.subr.mxu0 0.0
    %375 = vmatpush1.msra.mxu0 0.0
    %376 = vmatprep.subr.mxu0 0.0
    %377 = vmatpush1.msra.mxu0 0.0
    %378 = vmatprep.subr.mxu0 0.0
    %379 = vmatpush1.msra.mxu0 0.0
    %380 = vmatprep.subr.mxu0 0.0
    %381 = vmatpush1.msra.mxu0 0.0
    %382 = vmatprep.subr.mxu0 0.0
    %383 = vmatpush1.msra.mxu0 0.0
    %384 = vmatprep.subr.mxu0 0.0
    %385 = vmatpush1.msra.mxu0 0.0
    %386 = vmatprep.subr.mxu0 0.0
    %387 = vmatpush1.msra.mxu0 0.0
    %388 = vmatprep.subr.mxu0 0.0
    %389 = vmatpush1.msra.mxu0 0.0
    %390 = vmatprep.subr.mxu0 0.0
    %391 = vmatpush1.msra.mxu0 0.0
    %392 = vmatprep.mubr.f32.mxu0 0.0
    %393 = vmatmul.mubr.f32.gmra.mrb[0].mxu0 %v326
    %v394 = vpop.f32.mrb[0].mxu0
    %v395 = vadd.f32 %v323, %v394
    %v396 = vpop.f32.mrb[0].mxu0
    %397 = vdwg.mxu0
    %v398 = vmax.f32 %v395, 0.0
    %v399 = vlaneseq
    %v400 = vshrl.u32 %v399, 7
    %v401 = vsub.s32 0, %v400
    %v402 = vrot.slane %v398, %v401
    %v403 = vadd.f32 %v318, %v402
    %v404 = vadd.f32 %v319, %v402
    %v405 = vld [vmem:[%s3] sm:$0xff]
    %v406 = vld [vmem:[%s3 + $0x8] sm:$0xff]
    %v407 = vld [vmem:[%s3 + $0x10] sm:$0xff]
    %v409 = vsel %vm147, %v405, 0
    %v412 = vsel %vm147, %v406, 0
    %v415 = vsel %vm147, %v407, 0
    %417 = vmatprep.subr.mxu0 0.0
    %418 = vmatpush1.msra.mxu0 %v403
    %419 = vmatprep.subr.mxu0 0.0
    %420 = vmatpush1.msra.mxu0 %v404
    %421 = vmatprep.subr.mxu0 0.0
    %422 = vmatpush1.msra.mxu0 0.0
    %423 = vmatprep.subr.mxu0 0.0
    %424 = vmatpush1.msra.mxu0 0.0
    %425 = vmatprep.subr.mxu0 0.0
    %426 = vmatpush1.msra.mxu0 0.0
    %427 = vmatprep.subr.mxu0 0.0
    %428 = vmatpush1.msra.mxu0 0.0
    %429 = vmatprep.subr.mxu0 0.0
    %430 = vmatpush1.msra.mxu0 0.0
    %431 = vmatprep.subr.mxu0 0.0
    %432 = vmatpush1.msra.mxu0 0.0
    %433 = vmatprep.subr.mxu0 0.0
    %434 = vmatpush1.msra.mxu0 0.0
    %435 = vmatprep.subr.mxu0 0.0
    %436 = vmatpush1.msra.mxu0 0.0
    %437 = vmatprep.subr.mxu0 0.0
    %438 = vmatpush1.msra.mxu0 0.0
    %439 = vmatprep.subr.mxu0 0.0
    %440 = vmatpush1.msra.mxu0 0.0
    %441 = vmatprep.subr.mxu0 0.0
    %442 = vmatpush1.msra.mxu0 0.0
    %443 = vmatprep.subr.mxu0 0.0
    %444 = vmatpush1.msra.mxu0 0.0
    %445 = vmatprep.subr.mxu0 0.0
    %446 = vmatpush1.msra.mxu0 0.0
    %447 = vmatprep.subr.mxu0 0.0
    %448 = vmatpush1.msra.mxu0 0.0
    %449 = vmatprep.subr.mxu0 0.0
    %450 = vmatpush1.msra.mxu0 0.0
    %451 = vmatprep.subr.mxu0 0.0
    %452 = vmatpush1.msra.mxu0 0.0
    %453 = vmatprep.subr.mxu0 0.0
    %454 = vmatpush1.msra.mxu0 0.0
    %455 = vmatprep.subr.mxu0 0.0
    %456 = vmatpush1.msra.mxu0 0.0
    %457 = vmatprep.subr.mxu0 0.0
    %458 = vmatpush1.msra.mxu0 0.0
    %459 = vmatprep.subr.mxu0 0.0
    %460 = vmatpush1.msra.mxu0 0.0
    %461 = vmatprep.subr.mxu0 0.0
    %462 = vmatpush1.msra.mxu0 0.0
    %463 = vmatprep.subr.mxu0 0.0
    %464 = vmatpush1.msra.mxu0 0.0
    %465 = vmatprep.subr.mxu0 0.0
    %466 = vmatpush1.msra.mxu0 0.0
    %467 = vmatprep.subr.mxu0 0.0
    %468 = vmatpush1.msra.mxu0 0.0
    %469 = vmatprep.subr.mxu0 0.0
    %470 = vmatpush1.msra.mxu0 0.0
    %471 = vmatprep.subr.mxu0 0.0
    %472 = vmatpush1.msra.mxu0 0.0
    %473 = vmatprep.subr.mxu0 0.0
    %474 = vmatpush1.msra.mxu0 0.0
    %475 = vmatprep.subr.mxu0 0.0
    %476 = vmatpush1.msra.mxu0 0.0
    %477 = vmatprep.subr.mxu0 0.0
    %478 = vmatpush1.msra.mxu0 0.0
    %479 = vmatprep.subr.mxu0 0.0
    %480 = vmatpush1.msra.mxu0 0.0
    %481 = vmatprep.mubr.f32.mxu0 0.0
    %482 = vmatmul.mubr.f32.gmra.mrb[0].mxu0 %v409
    %v483 = vpop.f32.mrb[0].mxu0
    %v484 = vadd.f32 0.0, %v483
    %v485 = vpop.f32.mrb[0].mxu0
    %486 = vmatprep.mubr.f32.mxu0 0.0
    %487 = vmatmul.mubr.f32.gmra.mrb[0].mxu0 %v412
    %v488 = vpop.f32.mrb[0].mxu0
    %v489 = vadd.f32 0.0, %v488
    %v490 = vpop.f32.mrb[0].mxu0
    %491 = vmatprep.mubr.f32.mxu0 0.0
    %492 = vmatmul.mubr.f32.gmra.mrb[0].mxu0 %v415
    %v493 = vpop.f32.mrb[0].mxu0
    %v494 = vadd.f32 0.0, %v493
    %v495 = vpop.f32.mrb[0].mxu0
    %496 = vdwg.mxu0
    %v497 = vadd.f32 %v489, %v484
    %v498 = vsub.f32 %v497, %v494
    %v499 = vld [vmem:[%s9] sm:$0xff]
    %v500 = vld [vmem:[%s9 + $0x8] sm:$0xff]
    %v501 = vlaneseq
    %v502 = vshrl.u32 %v501, 7
    %v503 = vsub.s32 3, %v502
    %v504 = vrot.slane %v54, %v503
    %v506 = vsel %vm147, %v498, 0
    %508 = vmatprep.subr.mxu0 0.0
    %509 = vmatpush1.msra.mxu0 %v499
    %510 = vmatprep.subr.mxu0 0.0
    %511 = vmatpush1.msra.mxu0 %v500
    %512 = vmatprep.subr.mxu0 0.0
    %513 = vmatpush1.msra.mxu0 0.0
    %514 = vmatprep.subr.mxu0 0.0
    %515 = vmatpush1.msra.mxu0 0.0
    %516 = vmatprep.subr.mxu0 0.0
    %517 = vmatpush1.msra.mxu0 0.0
    %518 = vmatprep.subr.mxu0 0.0
    %519 = vmatpush1.msra.mxu0 0.0
    %520 = vmatprep.subr.mxu0 0.0
    %521 = vmatpush1.msra.mxu0 0.0
    %522 = vmatprep.subr.mxu0 0.0
    %523 = vmatpush1.msra.mxu0 0.0
    %524 = vmatprep.subr.mxu0 0.0
    %525 = vmatpush1.msra.mxu0 0.0
    %526 = vmatprep.subr.mxu0 0.0
    %527 = vmatpush1.msra.mxu0 0.0
    %528 = vmatprep.subr.mxu0 0.0
    %529 = vmatpush1.msra.mxu0 0.0
    %530 = vmatprep.subr.mxu0 0.0
    %531 = vmatpush1.msra.mxu0 0.0
    %532 = vmatprep.subr.mxu0 0.0
    %533 = vmatpush1.msra.mxu0 0.0
    %534 = vmatprep.subr.mxu0 0.0
    %535 = vmatpush1.msra.mxu0 0.0
    %536 = vmatprep.subr.mxu0 0.0
    %537 = vmatpush1.msra.mxu0 0.0
    %538 = vmatprep.subr.mxu0 0.0
    %539 = vmatpush1.msra.mxu0 0.0
    %540 = vmatprep.subr.mxu0 0.0
    %541 = vmatpush1.msra.mxu0 0.0
    %542 = vmatprep.subr.mxu0 0.0
    %543 = vmatpush1.msra.mxu0 0.0
    %544 = vmatprep.subr.mxu0 0.0
    %545 = vmatpush1.msra.mxu0 0.0
    %546 = vmatprep.subr.mxu0 0.0
    %547 = vmatpush1.msra.mxu0 0.0
    %548 = vmatprep.subr.mxu0 0.0
    %549 = vmatpush1.msra.mxu0 0.0
    %550 = vmatprep.subr.mxu0 0.0
    %551 = vmatpush1.msra.mxu0 0.0
    %552 = vmatprep.subr.mxu0 0.0
    %553 = vmatpush1.msra.mxu0 0.0
    %554 = vmatprep.subr.mxu0 0.0
    %555 = vmatpush1.msra.mxu0 0.0
    %556 = vmatprep.subr.mxu0 0.0
    %557 = vmatpush1.msra.mxu0 0.0
    %558 = vmatprep.subr.mxu0 0.0
    %559 = vmatpush1.msra.mxu0 0.0
    %560 = vmatprep.subr.mxu0 0.0
    %561 = vmatpush1.msra.mxu0 0.0
    %562 = vmatprep.subr.mxu0 0.0
    %563 = vmatpush1.msra.mxu0 0.0
    %564 = vmatprep.subr.mxu0 0.0
    %565 = vmatpush1.msra.mxu0 0.0
    %566 = vmatprep.subr.mxu0 0.0
    %567 = vmatpush1.msra.mxu0 0.0
    %568 = vmatprep.subr.mxu0 0.0
    %569 = vmatpush1.msra.mxu0 0.0
    %570 = vmatprep.subr.mxu0 0.0
    %571 = vmatpush1.msra.mxu0 0.0
    %572 = vmatprep.mubr.f32.mxu0 0.0
    %573 = vmatmul.mubr.f32.gmra.mrb[0].mxu0 %v506
    %v574 = vpop.f32.mrb[0].mxu0
    %v575 = vadd.f32 %v504, %v574
    %v576 = vpop.f32.mrb[0].mxu0
    %577 = vdwg.mxu0
    %v578 = vld [vmem:[%s4] sm:$0xff]
    %v579 = vld [vmem:[%s4 + $0x8] sm:$0xff]
    %v580 = vld [vmem:[%s5] sm:$0xff]
    %v581 = vld [vmem:[%s5 + $0x8] sm:$0xff]
    %v582 = vld [vmem:[%s10] sm:$0xff]
    %v583 = vld [vmem:[%s10 + $0x8] sm:$0xff]
    %v585 = vsel %vm61, %v578, 0
    %v588 = vsel %vm61, %v579, 0
    %590 = vmatprep.subr.mxu0 0.0
    %591 = vmatpush1.msra.mxu0 %v575
    %592 = vmatprep.subr.mxu0 0.0
    %593 = vmatpush1.msra.mxu0 0.0
    %594 = vmatprep.subr.mxu0 0.0
    %595 = vmatpush1.msra.mxu0 0.0
    %596 = vmatprep.subr.mxu0 0.0
    %597 = vmatpush1.msra.mxu0 0.0
    %598 = vmatprep.subr.mxu0 0.0
    %599 = vmatpush1.msra.mxu0 0.0
    %600 = vmatprep.subr.mxu0 0.0
    %601 = vmatpush1.msra.mxu0 0.0
    %602 = vmatprep.subr.mxu0 0.0
    %603 = vmatpush1.msra.mxu0 0.0
    %604 = vmatprep.subr.mxu0 0.0
    %605 = vmatpush1.msra.mxu0 0.0
    %606 = vmatprep.subr.mxu0 0.0
    %607 = vmatpush1.msra.mxu0 0.0
    %608 = vmatprep.subr.mxu0 0.0
    %609 = vmatpush1.msra.mxu0 0.0
    %610 = vmatprep.subr.mxu0 0.0
    %611 = vmatpush1.msra.mxu0 0.0
    %612 = vmatprep.subr.mxu0 0.0
    %613 = vmatpush1.msra.mxu0 0.0
    %614 = vmatprep.subr.mxu0 0.0
    %615 = vmatpush1.msra.mxu0 0.0
    %616 = vmatprep.subr.mxu0 0.0
    %617 = vmatpush1.msra.mxu0 0.0
    %618 = vmatprep.subr.mxu0 0.0
    %619 = vmatpush1.msra.mxu0 0.0
    %620 = vmatprep.subr.mxu0 0.0
    %621 = vmatpush1.msra.mxu0 0.0
    %622 = vmatprep.subr.mxu0 0.0
    %623 = vmatpush1.msra.mxu0 0.0
    %624 = vmatprep.subr.mxu0 0.0
    %625 = vmatpush1.msra.mxu0 0.0
    %626 = vmatprep.subr.mxu0 0.0
    %627 = vmatpush1.msra.mxu0 0.0
    %628 = vmatprep.subr.mxu0 0.0
    %629 = vmatpush1.msra.mxu0 0.0
    %630 = vmatprep.subr.mxu0 0.0
    %631 = vmatpush1.msra.mxu0 0.0
    %632 = vmatprep.subr.mxu0 0.0
    %633 = vmatpush1.msra.mxu0 0.0
    %634 = vmatprep.subr.mxu0 0.0
    %635 = vmatpush1.msra.mxu0 0.0
    %636 = vmatprep.subr.mxu0 0.0
    %637 = vmatpush1.msra.mxu0 0.0
    %638 = vmatprep.subr.mxu0 0.0
    %639 = vmatpush1.msra.mxu0 0.0
    %640 = vmatprep.subr.mxu0 0.0
    %641 = vmatpush1.msra.mxu0 0.0
    %642 = vmatprep.subr.mxu0 0.0
    %643 = vmatpush1.msra.mxu0 0.0
    %644 = vmatprep.subr.mxu0 0.0
    %645 = vmatpush1.msra.mxu0 0.0
    %646 = vmatprep.subr.mxu0 0.0
    %647 = vmatpush1.msra.mxu0 0.0
    %648 = vmatprep.subr.mxu0 0.0
    %649 = vmatpush1.msra.mxu0 0.0
    %650 = vmatprep.subr.mxu0 0.0
    %651 = vmatpush1.msra.mxu0 0.0
    %652 = vmatprep.subr.mxu0 0.0
    %653 = vmatpush1.msra.mxu0 0.0
    %654 = vmatprep.mubr.f32.mxu0 0.0
    %655 = vmatmul.mubr.f32.gmra.mrb[0].mxu0 %v585
    %v656 = vpop.f32.mrb[0].mxu0
    %v657 = vadd.f32 0.0, %v656
    %v658 = vpop.f32.mrb[0].mxu0
    %659 = vmatprep.mubr.f32.mxu0 0.0
    %660 = vmatmul.mubr.f32.gmra.mrb[0].mxu0 %v588
    %v661 = vpop.f32.mrb[0].mxu0
    %v662 = vadd.f32 0.0, %v661
    %v663 = vpop.f32.mrb[0].mxu0
    %664 = vdwg.mxu0
    %666 = vrot.lane.b32.xlu0 %v575, 112
    %v667 = vpop.permute.xlu0 %666
    %v670 = vsel %vm61, %v580, 0
    %v673 = vsel %vm61, %v581, 0
    %675 = vmatprep.subr.mxu0 0.0
    %676 = vmatpush1.msra.mxu0 %v667
    %677 = vmatprep.subr.mxu0 0.0
    %678 = vmatpush1.msra.mxu0 0.0
    %679 = vmatprep.subr.mxu0 0.0
    %680 = vmatpush1.msra.mxu0 0.0
    %681 = vmatprep.subr.mxu0 0.0
    %682 = vmatpush1.msra.mxu0 0.0
    %683 = vmatprep.subr.mxu0 0.0
    %684 = vmatpush1.msra.mxu0 0.0
    %685 = vmatprep.subr.mxu0 0.0
    %686 = vmatpush1.msra.mxu0 0.0
    %687 = vmatprep.subr.mxu0 0.0
    %688 = vmatpush1.msra.mxu0 0.0
    %689 = vmatprep.subr.mxu0 0.0
    %690 = vmatpush1.msra.mxu0 0.0
    %691 = vmatprep.subr.mxu0 0.0
    %692 = vmatpush1.msra.mxu0 0.0
    %693 = vmatprep.subr.mxu0 0.0
    %694 = vmatpush1.msra.mxu0 0.0
    %695 = vmatprep.subr.mxu0 0.0
    %696 = vmatpush1.msra.mxu0 0.0
    %697 = vmatprep.subr.mxu0 0.0
    %698 = vmatpush1.msra.mxu0 0.0
    %699 = vmatprep.subr.mxu0 0.0
    %700 = vmatpush1.msra.mxu0 0.0
    %701 = vmatprep.subr.mxu0 0.0
    %702 = vmatpush1.msra.mxu0 0.0
    %703 = vmatprep.subr.mxu0 0.0
    %704 = vmatpush1.msra.mxu0 0.0
    %705 = vmatprep.subr.mxu0 0.0
    %706 = vmatpush1.msra.mxu0 0.0
    %707 = vmatprep.subr.mxu0 0.0
    %708 = vmatpush1.msra.mxu0 0.0
    %709 = vmatprep.subr.mxu0 0.0
    %710 = vmatpush1.msra.mxu0 0.0
    %711 = vmatprep.subr.mxu0 0.0
    %712 = vmatpush1.msra.mxu0 0.0
    %713 = vmatprep.subr.mxu0 0.0
    %714 = vmatpush1.msra.mxu0 0.0
    %715 = vmatprep.subr.mxu0 0.0
    %716 = vmatpush1.msra.mxu0 0.0
    %717 = vmatprep.subr.mxu0 0.0
    %718 = vmatpush1.msra.mxu0 0.0
    %719 = vmatprep.subr.mxu0 0.0
    %720 = vmatpush1.msra.mxu0 0.0
    %721 = vmatprep.subr.mxu0 0.0
    %722 = vmatpush1.msra.mxu0 0.0
    %723 = vmatprep.subr.mxu0 0.0
    %724 = vmatpush1.msra.mxu0 0.0
    %725 = vmatprep.subr.mxu0 0.0
    %726 = vmatpush1.msra.mxu0 0.0
    %727 = vmatprep.subr.mxu0 0.0
    %728 = vmatpush1.msra.mxu0 0.0
    %729 = vmatprep.subr.mxu0 0.0
    %730 = vmatpush1.msra.mxu0 0.0
    %731 = vmatprep.subr.mxu0 0.0
    %732 = vmatpush1.msra.mxu0 0.0
    %733 = vmatprep.subr.mxu0 0.0
    %734 = vmatpush1.msra.mxu0 0.0
    %735 = vmatprep.subr.mxu0 0.0
    %736 = vmatpush1.msra.mxu0 0.0
    %737 = vmatprep.subr.mxu0 0.0
    %738 = vmatpush1.msra.mxu0 0.0
    %739 = vmatprep.mubr.f32.mxu0 0.0
    %740 = vmatmul.mubr.f32.gmra.mrb[0].mxu0 %v670
    %v741 = vpop.f32.mrb[0].mxu0
    %v742 = vadd.f32 0.0, %v741
    %v743 = vpop.f32.mrb[0].mxu0
    %744 = vmatprep.mubr.f32.mxu0 0.0
    %745 = vmatmul.mubr.f32.gmra.mrb[0].mxu0 %v673
    %v746 = vpop.f32.mrb[0].mxu0
    %v747 = vadd.f32 0.0, %v746
    %v748 = vpop.f32.mrb[0].mxu0
    %749 = vdwg.mxu0
    %750 = vrot.lane.b32.xlu0 %v575, 96
    %v751 = vpop.permute.xlu0 %750
    %753 = vmatprep.subr.mxu0 0.0
    %754 = vmatpush1.msra.mxu0 %v751
    %755 = vmatprep.subr.mxu0 0.0
    %756 = vmatpush1.msra.mxu0 0.0
    %757 = vmatprep.subr.mxu0 0.0
    %758 = vmatpush1.msra.mxu0 0.0
    %759 = vmatprep.subr.mxu0 0.0
    %760 = vmatpush1.msra.mxu0 0.0
    %761 = vmatprep.subr.mxu0 0.0
    %762 = vmatpush1.msra.mxu0 0.0
    %763 = vmatprep.subr.mxu0 0.0
    %764 = vmatpush1.msra.mxu0 0.0
    %765 = vmatprep.subr.mxu0 0.0
    %766 = vmatpush1.msra.mxu0 0.0
    %767 = vmatprep.subr.mxu0 0.0
    %768 = vmatpush1.msra.mxu0 0.0
    %769 = vmatprep.subr.mxu0 0.0
    %770 = vmatpush1.msra.mxu0 0.0
    %771 = vmatprep.subr.mxu0 0.0
    %772 = vmatpush1.msra.mxu0 0.0
    %773 = vmatprep.subr.mxu0 0.0
    %774 = vmatpush1.msra.mxu0 0.0
    %775 = vmatprep.subr.mxu0 0.0
    %776 = vmatpush1.msra.mxu0 0.0
    %777 = vmatprep.subr.mxu0 0.0
    %778 = vmatpush1.msra.mxu0 0.0
    %779 = vmatprep.subr.mxu0 0.0
    %780 = vmatpush1.msra.mxu0 0.0
    %781 = vmatprep.subr.mxu0 0.0
    %782 = vmatpush1.msra.mxu0 0.0
    %783 = vmatprep.subr.mxu0 0.0
    %784 = vmatpush1.msra.mxu0 0.0
    %785 = vmatprep.subr.mxu0 0.0
    %786 = vmatpush1.msra.mxu0 0.0
    %787 = vmatprep.subr.mxu0 0.0
    %788 = vmatpush1.msra.mxu0 0.0
    %789 = vmatprep.subr.mxu0 0.0
    %790 = vmatpush1.msra.mxu0 0.0
    %791 = vmatprep.subr.mxu0 0.0
    %792 = vmatpush1.msra.mxu0 0.0
    %793 = vmatprep.subr.mxu0 0.0
    %794 = vmatpush1.msra.mxu0 0.0
    %795 = vmatprep.subr.mxu0 0.0
    %796 = vmatpush1.msra.mxu0 0.0
    %797 = vmatprep.subr.mxu0 0.0
    %798 = vmatpush1.msra.mxu0 0.0
    %799 = vmatprep.subr.mxu0 0.0
    %800 = vmatpush1.msra.mxu0 0.0
    %801 = vmatprep.subr.mxu0 0.0
    %802 = vmatpush1.msra.mxu0 0.0
    %803 = vmatprep.subr.mxu0 0.0
    %804 = vmatpush1.msra.mxu0 0.0
    %805 = vmatprep.subr.mxu0 0.0
    %806 = vmatpush1.msra.mxu0 0.0
    %807 = vmatprep.subr.mxu0 0.0
    %808 = vmatpush1.msra.mxu0 0.0
    %809 = vmatprep.subr.mxu0 0.0
    %810 = vmatpush1.msra.mxu0 0.0
    %811 = vmatprep.subr.mxu0 0.0
    %812 = vmatpush1.msra.mxu0 0.0
    %813 = vmatprep.subr.mxu0 0.0
    %814 = vmatpush1.msra.mxu0 0.0
    %815 = vmatprep.subr.mxu0 0.0
    %816 = vmatpush1.msra.mxu0 0.0
    %817 = vmatprep.mubr.f32.mxu0 0.0
    %818 = vmatmul.mubr.f32.gmra.mrb[0].mxu0 %v670
    %v819 = vpop.f32.mrb[0].mxu0
    %v820 = vadd.f32 0.0, %v819
    %v821 = vpop.f32.mrb[0].mxu0
    %822 = vmatprep.mubr.f32.mxu0 0.0
    %823 = vmatmul.mubr.f32.gmra.mrb[0].mxu0 %v673
    %v824 = vpop.f32.mrb[0].mxu0
    %v825 = vadd.f32 0.0, %v824
    %v826 = vpop.f32.mrb[0].mxu0
    %827 = vdwg.mxu0
    %v828 = vmul.f32 %v657, %v742
    %v829 = vmul.f32 %v662, %v747
    %v831 = vsel %vm147, %v828, 0
    %v834 = vsel %vm147, %v829, 0
    %836 = vmatprep.subr.mxu0 0.0
    %837 = vmatpush1.msra.mxu0 %v582
    %838 = vmatprep.subr.mxu0 0.0
    %839 = vmatpush1.msra.mxu0 %v583
    %840 = vmatprep.subr.mxu0 0.0
    %841 = vmatpush1.msra.mxu0 0.0
    %842 = vmatprep.subr.mxu0 0.0
    %843 = vmatpush1.msra.mxu0 0.0
    %844 = vmatprep.subr.mxu0 0.0
    %845 = vmatpush1.msra.mxu0 0.0
    %846 = vmatprep.subr.mxu0 0.0
    %847 = vmatpush1.msra.mxu0 0.0
    %848 = vmatprep.subr.mxu0 0.0
    %849 = vmatpush1.msra.mxu0 0.0
    %850 = vmatprep.subr.mxu0 0.0
    %851 = vmatpush1.msra.mxu0 0.0
    %852 = vmatprep.subr.mxu0 0.0
    %853 = vmatpush1.msra.mxu0 0.0
    %854 = vmatprep.subr.mxu0 0.0
    %855 = vmatpush1.msra.mxu0 0.0
    %856 = vmatprep.subr.mxu0 0.0
    %857 = vmatpush1.msra.mxu0 0.0
    %858 = vmatprep.subr.mxu0 0.0
    %859 = vmatpush1.msra.mxu0 0.0
    %860 = vmatprep.subr.mxu0 0.0
    %861 = vmatpush1.msra.mxu0 0.0
    %862 = vmatprep.subr.mxu0 0.0
    %863 = vmatpush1.msra.mxu0 0.0
    %864 = vmatprep.subr.mxu0 0.0
    %865 = vmatpush1.msra.mxu0 0.0
    %866 = vmatprep.subr.mxu0 0.0
    %867 = vmatpush1.msra.mxu0 0.0
    %868 = vmatprep.subr.mxu0 0.0
    %869 = vmatpush1.msra.mxu0 0.0
    %870 = vmatprep.subr.mxu0 0.0
    %871 = vmatpush1.msra.mxu0 0.0
    %872 = vmatprep.subr.mxu0 0.0
    %873 = vmatpush1.msra.mxu0 0.0
    %874 = vmatprep.subr.mxu0 0.0
    %875 = vmatpush1.msra.mxu0 0.0
    %876 = vmatprep.subr.mxu0 0.0
    %877 = vmatpush1.msra.mxu0 0.0
    %878 = vmatprep.subr.mxu0 0.0
    %879 = vmatpush1.msra.mxu0 0.0
    %880 = vmatprep.subr.mxu0 0.0
    %881 = vmatpush1.msra.mxu0 0.0
    %882 = vmatprep.subr.mxu0 0.0
    %883 = vmatpush1.msra.mxu0 0.0
    %884 = vmatprep.subr.mxu0 0.0
    %885 = vmatpush1.msra.mxu0 0.0
    %886 = vmatprep.subr.mxu0 0.0
    %887 = vmatpush1.msra.mxu0 0.0
    %888 = vmatprep.subr.mxu0 0.0
    %889 = vmatpush1.msra.mxu0 0.0
    %890 = vmatprep.subr.mxu0 0.0
    %891 = vmatpush1.msra.mxu0 0.0
    %892 = vmatprep.subr.mxu0 0.0
    %893 = vmatpush1.msra.mxu0 0.0
    %894 = vmatprep.subr.mxu0 0.0
    %895 = vmatpush1.msra.mxu0 0.0
    %896 = vmatprep.subr.mxu0 0.0
    %897 = vmatpush1.msra.mxu0 0.0
    %898 = vmatprep.subr.mxu0 0.0
    %899 = vmatpush1.msra.mxu0 0.0
    %900 = vmatprep.mubr.f32.mxu0 0.0
    %901 = vmatmul.mubr.f32.gmra.mrb[0].mxu0 %v831
    %v902 = vpop.f32.mrb[0].mxu0
    %v903 = vadd.f32 0.0, %v902
    %v904 = vpop.f32.mrb[0].mxu0
    %905 = vmatprep.mubr.f32.mxu0 0.0
    %906 = vmatmul.mubr.f32.gmra.mrb[0].mxu0 %v834
    %v907 = vpop.f32.mrb[0].mxu0
    %v908 = vadd.f32 0.0, %v907
    %v909 = vpop.f32.mrb[0].mxu0
    %910 = vdwg.mxu0
    %vm911 = vcmask 31744
    %v912 = vsel %vm911, %v903, -inf
    %v913 = vsel %vm911, %v908, -inf
    %v914 = vmax.f32 %v912, %v913
    %v915 = vrot.slane %v914, 4
    %v916 = vmax.f32 %v914, %v915
    %v917 = vrot.slane %v916, 2
    %v918 = vmax.f32 %v916, %v917
    %v919 = vrot.slane %v918, 1
    %v920 = vmax.f32 %v918, %v919
    %v921 = vsub.f32 %v903, %v920
    %v922 = vsub.f32 %v908, %v920
    %v923 = vmul.f32 %v921, 1.442695
    %v924 = vpow.pop %v923
    %v925 = vmul.f32 %v922, 1.442695
    %v926 = vpow.pop %v925
    %v927 = vsel %vm911, %v924, 0.0
    %v928 = vsel %vm911, %v926, 0.0
    %v929 = vadd.f32 %v927, %v928
    %v930 = vrot.slane %v929, 4
    %v931 = vadd.f32 %v929, %v930
    %v932 = vrot.slane %v931, 2
    %v933 = vadd.f32 %v931, %v932
    %v934 = vrot.slane %v933, 1
    %v935 = vadd.f32 %v933, %v934
    %v936 = vrcp.pop %v935
    %v937 = vmul.f32 %v924, %v936
    %v938 = vmul.f32 %v926, %v936
    %939 = vxpose.xlu0.b32.start [1/16] %v578, 128
    %940 = vxpose.xlu0.b32.cont [2/16] %v579, 128
    %941 = vxpose.xlu0.b32.cont [3/16] 0.0, 128
    %942 = vxpose.xlu0.b32.cont [4/16] 0.0, 128
    %943 = vxpose.xlu0.b32.cont [5/16] 0.0, 128
    %944 = vxpose.xlu0.b32.cont [6/16] 0.0, 128
    %945 = vxpose.xlu0.b32.cont [7/16] 0.0, 128
    %946 = vxpose.xlu0.b32.cont [8/16] 0.0, 128
    %947 = vxpose.xlu0.b32.cont [9/16] 0.0, 128
    %948 = vxpose.xlu0.b32.cont [10/16] 0.0, 128
    %949 = vxpose.xlu0.b32.cont [11/16] 0.0, 128
    %950 = vxpose.xlu0.b32.cont [12/16] 0.0, 128
    %951 = vxpose.xlu0.b32.cont [13/16] 0.0, 128
    %952 = vxpose.xlu0.b32.cont [14/16] 0.0, 128
    %953 = vxpose.xlu0.b32.cont [15/16] 0.0, 128
    %954 = vxpose.xlu0.b32.end [16/16] 0.0, 128
    %v955 = vpop.trf.xlu0
    %v956 = vpop.trf.xlu0
    %v957 = vpop.trf.xlu0
    %v958 = vpop.trf.xlu0
    %v959 = vpop.trf.xlu0
    %v960 = vpop.trf.xlu0
    %v961 = vpop.trf.xlu0
    %v962 = vpop.trf.xlu0
    %v963 = vpop.trf.xlu0
    %v964 = vpop.trf.xlu0
    %v965 = vpop.trf.xlu0
    %v966 = vpop.trf.xlu0
    %v967 = vpop.trf.xlu0
    %v968 = vpop.trf.xlu0
    %v969 = vpop.trf.xlu0
    %v970 = vpop.trf.xlu0
    %v972 = vsel %vm147, %v955, 0
    %974 = vmatprep.subr.mxu0 0.0
    %975 = vmatpush1.msra.mxu0 %v937
    %976 = vmatprep.subr.mxu0 0.0
    %977 = vmatpush1.msra.mxu0 %v938
    %978 = vmatprep.subr.mxu0 0.0
    %979 = vmatpush1.msra.mxu0 0.0
    %980 = vmatprep.subr.mxu0 0.0
    %981 = vmatpush1.msra.mxu0 0.0
    %982 = vmatprep.subr.mxu0 0.0
    %983 = vmatpush1.msra.mxu0 0.0
    %984 = vmatprep.subr.mxu0 0.0
    %985 = vmatpush1.msra.mxu0 0.0
    %986 = vmatprep.subr.mxu0 0.0
    %987 = vmatpush1.msra.mxu0 0.0
    %988 = vmatprep.subr.mxu0 0.0
    %989 = vmatpush1.msra.mxu0 0.0
    %990 = vmatprep.subr.mxu0 0.0
    %991 = vmatpush1.msra.mxu0 0.0
    %992 = vmatprep.subr.mxu0 0.0
    %993 = vmatpush1.msra.mxu0 0.0
    %994 = vmatprep.subr.mxu0 0.0
    %995 = vmatpush1.msra.mxu0 0.0
    %996 = vmatprep.subr.mxu0 0.0
    %997 = vmatpush1.msra.mxu0 0.0
    %998 = vmatprep.subr.mxu0 0.0
    %999 = vmatpush1.msra.mxu0 0.0
    %1000 = vmatprep.subr.mxu0 0.0
    %1001 = vmatpush1.msra.mxu0 0.0
    %1002 = vmatprep.subr.mxu0 0.0
    %1003 = vmatpush1.msra.mxu0 0.0
    %1004 = vmatprep.subr.mxu0 0.0
    %1005 = vmatpush1.msra.mxu0 0.0
    %1006 = vmatprep.subr.mxu0 0.0
    %1007 = vmatpush1.msra.mxu0 0.0
    %1008 = vmatprep.subr.mxu0 0.0
    %1009 = vmatpush1.msra.mxu0 0.0
    %1010 = vmatprep.subr.mxu0 0.0
    %1011 = vmatpush1.msra.mxu0 0.0
    %1012 = vmatprep.subr.mxu0 0.0
    %1013 = vmatpush1.msra.mxu0 0.0
    %1014 = vmatprep.subr.mxu0 0.0
    %1015 = vmatpush1.msra.mxu0 0.0
    %1016 = vmatprep.subr.mxu0 0.0
    %1017 = vmatpush1.msra.mxu0 0.0
    %1018 = vmatprep.subr.mxu0 0.0
    %1019 = vmatpush1.msra.mxu0 0.0
    %1020 = vmatprep.subr.mxu0 0.0
    %1021 = vmatpush1.msra.mxu0 0.0
    %1022 = vmatprep.subr.mxu0 0.0
    %1023 = vmatpush1.msra.mxu0 0.0
    %1024 = vmatprep.subr.mxu0 0.0
    %1025 = vmatpush1.msra.mxu0 0.0
    %1026 = vmatprep.subr.mxu0 0.0
    %1027 = vmatpush1.msra.mxu0 0.0
    %1028 = vmatprep.subr.mxu0 0.0
    %1029 = vmatpush1.msra.mxu0 0.0
    %1030 = vmatprep.subr.mxu0 0.0
    %1031 = vmatpush1.msra.mxu0 0.0
    %1032 = vmatprep.subr.mxu0 0.0
    %1033 = vmatpush1.msra.mxu0 0.0
    %1034 = vmatprep.subr.mxu0 0.0
    %1035 = vmatpush1.msra.mxu0 0.0
    %1036 = vmatprep.subr.mxu0 0.0
    %1037 = vmatpush1.msra.mxu0 0.0
    %1038 = vmatprep.mubr.f32.mxu0 0.0
    %1039 = vmatmul.mubr.f32.gmra.mrb[0].mxu0 %v972
    %v1040 = vpop.f32.mrb[0].mxu0
    %v1041 = vadd.f32 0.0, %v1040
    %v1042 = vpop.f32.mrb[0].mxu0
    %1043 = vdwg.mxu0
    %1044 = vmatprep.subr.mxu0 0.0
    %1045 = vmatpush1.msra.mxu0 %v1041
    %1046 = vmatprep.subr.mxu0 0.0
    %1047 = vmatpush1.msra.mxu0 0.0
    %1048 = vmatprep.subr.mxu0 0.0
    %1049 = vmatpush1.msra.mxu0 0.0
    %1050 = vmatprep.subr.mxu0 0.0
    %1051 = vmatpush1.msra.mxu0 0.0
    %1052 = vmatprep.subr.mxu0 0.0
    %1053 = vmatpush1.msra.mxu0 0.0
    %1054 = vmatprep.subr.mxu0 0.0
    %1055 = vmatpush1.msra.mxu0 0.0
    %1056 = vmatprep.subr.mxu0 0.0
    %1057 = vmatpush1.msra.mxu0 0.0
    %1058 = vmatprep.subr.mxu0 0.0
    %1059 = vmatpush1.msra.mxu0 0.0
    %1060 = vmatprep.subr.mxu0 0.0
    %1061 = vmatpush1.msra.mxu0 0.0
    %1062 = vmatprep.subr.mxu0 0.0
    %1063 = vmatpush1.msra.mxu0 0.0
    %1064 = vmatprep.subr.mxu0 0.0
    %1065 = vmatpush1.msra.mxu0 0.0
    %1066 = vmatprep.subr.mxu0 0.0
    %1067 = vmatpush1.msra.mxu0 0.0
    %1068 = vmatprep.subr.mxu0 0.0
    %1069 = vmatpush1.msra.mxu0 0.0
    %1070 = vmatprep.subr.mxu0 0.0
    %1071 = vmatpush1.msra.mxu0 0.0
    %1072 = vmatprep.subr.mxu0 0.0
    %1073 = vmatpush1.msra.mxu0 0.0
    %1074 = vmatprep.subr.mxu0 0.0
    %1075 = vmatpush1.msra.mxu0 0.0
    %1076 = vmatprep.subr.mxu0 0.0
    %1077 = vmatpush1.msra.mxu0 0.0
    %1078 = vmatprep.subr.mxu0 0.0
    %1079 = vmatpush1.msra.mxu0 0.0
    %1080 = vmatprep.subr.mxu0 0.0
    %1081 = vmatpush1.msra.mxu0 0.0
    %1082 = vmatprep.subr.mxu0 0.0
    %1083 = vmatpush1.msra.mxu0 0.0
    %1084 = vmatprep.subr.mxu0 0.0
    %1085 = vmatpush1.msra.mxu0 0.0
    %1086 = vmatprep.subr.mxu0 0.0
    %1087 = vmatpush1.msra.mxu0 0.0
    %1088 = vmatprep.subr.mxu0 0.0
    %1089 = vmatpush1.msra.mxu0 0.0
    %1090 = vmatprep.subr.mxu0 0.0
    %1091 = vmatpush1.msra.mxu0 0.0
    %1092 = vmatprep.subr.mxu0 0.0
    %1093 = vmatpush1.msra.mxu0 0.0
    %1094 = vmatprep.subr.mxu0 0.0
    %1095 = vmatpush1.msra.mxu0 0.0
    %1096 = vmatprep.subr.mxu0 0.0
    %1097 = vmatpush1.msra.mxu0 0.0
    %1098 = vmatprep.subr.mxu0 0.0
    %1099 = vmatpush1.msra.mxu0 0.0
    %1100 = vmatprep.subr.mxu0 0.0
    %1101 = vmatpush1.msra.mxu0 0.0
    %1102 = vmatprep.subr.mxu0 0.0
    %1103 = vmatpush1.msra.mxu0 0.0
    %1104 = vmatprep.subr.mxu0 0.0
    %1105 = vmatpush1.msra.mxu0 0.0
    %1106 = vmatprep.subr.mxu0 0.0
    %1107 = vmatpush1.msra.mxu0 0.0
    %1108 = vmatprep.mubr.f32.mxu0 0.0
    %1109 = vmatmul.mubr.f32.gmra.mrb[0].mxu0 %v585
    %v1110 = vpop.f32.mrb[0].mxu0
    %v1111 = vadd.f32 0.0, %v1110
    %v1112 = vpop.f32.mrb[0].mxu0
    %1113 = vmatprep.mubr.f32.mxu0 0.0
    %1114 = vmatmul.mubr.f32.gmra.mrb[0].mxu0 %v588
    %v1115 = vpop.f32.mrb[0].mxu0
    %v1116 = vadd.f32 0.0, %v1115
    %v1117 = vpop.f32.mrb[0].mxu0
    %1118 = vdwg.mxu0
    %v1120 = vsel %vm911, %v1111, 0
    %v1123 = vsel %vm911, %v1116, 0
    %v1126 = vsel %vm911, %v582, 0
    %v1129 = vsel %vm911, %v583, 0
    %1131 = vmatprep.subr.mxu0 0.0
    %1132 = vmatpush1.xpose.msra.mxu0 %v1126
    %1133 = vmatprep.subr.mxu0 0.0
    %1134 = vmatpush1.xpose.msra.mxu0 %v1129
    %1135 = vmatprep.subr.mxu0 0.0
    %1136 = vmatpush1.xpose.msra.mxu0 0.0
    %1137 = vmatprep.subr.mxu0 0.0
    %1138 = vmatpush1.xpose.msra.mxu0 0.0
    %1139 = vmatprep.subr.mxu0 0.0
    %1140 = vmatpush1.xpose.msra.mxu0 0.0
    %1141 = vmatprep.subr.mxu0 0.0
    %1142 = vmatpush1.xpose.msra.mxu0 0.0
    %1143 = vmatprep.subr.mxu0 0.0
    %1144 = vmatpush1.xpose.msra.mxu0 0.0
    %1145 = vmatprep.subr.mxu0 0.0
    %1146 = vmatpush1.xpose.msra.mxu0 0.0
    %1147 = vmatprep.subr.mxu0 0.0
    %1148 = vmatpush1.xpose.msra.mxu0 0.0
    %1149 = vmatprep.subr.mxu0 0.0
    %1150 = vmatpush1.xpose.msra.mxu0 0.0
    %1151 = vmatprep.subr.mxu0 0.0
    %1152 = vmatpush1.xpose.msra.mxu0 0.0
    %1153 = vmatprep.subr.mxu0 0.0
    %1154 = vmatpush1.xpose.msra.mxu0 0.0
    %1155 = vmatprep.subr.mxu0 0.0
    %1156 = vmatpush1.xpose.msra.mxu0 0.0
    %1157 = vmatprep.subr.mxu0 0.0
    %1158 = vmatpush1.xpose.msra.mxu0 0.0
    %1159 = vmatprep.subr.mxu0 0.0
    %1160 = vmatpush1.xpose.msra.mxu0 0.0
    %1161 = vmatprep.subr.mxu0 0.0
    %1162 = vmatpush1.xpose.msra.mxu0 0.0
    %1163 = vmatprep.subr.mxu0 0.0
    %1164 = vmatpush1.xpose.msra.mxu0 0.0
    %1165 = vmatprep.subr.mxu0 0.0
    %1166 = vmatpush1.xpose.msra.mxu0 0.0
    %1167 = vmatprep.subr.mxu0 0.0
    %1168 = vmatpush1.xpose.msra.mxu0 0.0
    %1169 = vmatprep.subr.mxu0 0.0
    %1170 = vmatpush1.xpose.msra.mxu0 0.0
    %1171 = vmatprep.subr.mxu0 0.0
    %1172 = vmatpush1.xpose.msra.mxu0 0.0
    %1173 = vmatprep.subr.mxu0 0.0
    %1174 = vmatpush1.xpose.msra.mxu0 0.0
    %1175 = vmatprep.subr.mxu0 0.0
    %1176 = vmatpush1.xpose.msra.mxu0 0.0
    %1177 = vmatprep.subr.mxu0 0.0
    %1178 = vmatpush1.xpose.msra.mxu0 0.0
    %1179 = vmatprep.subr.mxu0 0.0
    %1180 = vmatpush1.xpose.msra.mxu0 0.0
    %1181 = vmatprep.subr.mxu0 0.0
    %1182 = vmatpush1.xpose.msra.mxu0 0.0
    %1183 = vmatprep.subr.mxu0 0.0
    %1184 = vmatpush1.xpose.msra.mxu0 0.0
    %1185 = vmatprep.subr.mxu0 0.0
    %1186 = vmatpush1.xpose.msra.mxu0 0.0
    %1187 = vmatprep.subr.mxu0 0.0
    %1188 = vmatpush1.xpose.msra.mxu0 0.0
    %1189 = vmatprep.subr.mxu0 0.0
    %1190 = vmatpush1.xpose.msra.mxu0 0.0
    %1191 = vmatprep.subr.mxu0 0.0
    %1192 = vmatpush1.xpose.msra.mxu0 0.0
    %1193 = vmatprep.subr.mxu0 0.0
    %1194 = vmatpush1.xpose.msra.mxu0 0.0
    %1195 = vmatprep.mubr.f32.mxu0 0.0
    %1196 = vmatmul.mubr.f32.gmra.mrb[0].mxu0 %v1120
    %v1197 = vpop.f32.mrb[0].mxu0
    %v1198 = vadd.f32 0.0, %v1197
    %v1199 = vpop.f32.mrb[0].mxu0
    %1200 = vmatprep.mubr.f32.mxu0 0.0
    %1201 = vmatmul.mubr.f32.gmra.mrb[0].mxu0 %v1123
    %v1202 = vpop.f32.mrb[0].mxu0
    %v1203 = vadd.f32 0.0, %v1202
    %v1204 = vpop.f32.mrb[0].mxu0
    %1205 = vdwg.mxu0
    %v1206 = vmul.f32 %v1198, %v820
    %v1207 = vmul.f32 %v1203, %v825
    %1208 = vmatprep.subr.mxu0 0.0
    %1209 = vmatpush1.msra.mxu0 %v1206
    %1210 = vmatprep.subr.mxu0 0.0
    %1211 = vmatpush1.msra.mxu0 %v1207
    %1212 = vmatprep.subr.mxu0 0.0
    %1213 = vmatpush1.msra.mxu0 0.0
    %1214 = vmatprep.subr.mxu0 0.0
    %1215 = vmatpush1.msra.mxu0 0.0
    %1216 = vmatprep.subr.mxu0 0.0
    %1217 = vmatpush1.msra.mxu0 0.0
    %1218 = vmatprep.subr.mxu0 0.0
    %1219 = vmatpush1.msra.mxu0 0.0
    %1220 = vmatprep.subr.mxu0 0.0
    %1221 = vmatpush1.msra.mxu0 0.0
    %1222 = vmatprep.subr.mxu0 0.0
    %1223 = vmatpush1.msra.mxu0 0.0
    %1224 = vmatprep.subr.mxu0 0.0
    %1225 = vmatpush1.msra.mxu0 0.0
    %1226 = vmatprep.subr.mxu0 0.0
    %1227 = vmatpush1.msra.mxu0 0.0
    %1228 = vmatprep.subr.mxu0 0.0
    %1229 = vmatpush1.msra.mxu0 0.0
    %1230 = vmatprep.subr.mxu0 0.0
    %1231 = vmatpush1.msra.mxu0 0.0
    %1232 = vmatprep.subr.mxu0 0.0
    %1233 = vmatpush1.msra.mxu0 0.0
    %1234 = vmatprep.subr.mxu0 0.0
    %1235 = vmatpush1.msra.mxu0 0.0
    %1236 = vmatprep.subr.mxu0 0.0
    %1237 = vmatpush1.msra.mxu0 0.0
    %1238 = vmatprep.subr.mxu0 0.0
    %1239 = vmatpush1.msra.mxu0 0.0
    %1240 = vmatprep.subr.mxu0 0.0
    %1241 = vmatpush1.msra.mxu0 0.0
    %1242 = vmatprep.subr.mxu0 0.0
    %1243 = vmatpush1.msra.mxu0 0.0
    %1244 = vmatprep.subr.mxu0 0.0
    %1245 = vmatpush1.msra.mxu0 0.0
    %1246 = vmatprep.subr.mxu0 0.0
    %1247 = vmatpush1.msra.mxu0 0.0
    %1248 = vmatprep.subr.mxu0 0.0
    %1249 = vmatpush1.msra.mxu0 0.0
    %1250 = vmatprep.subr.mxu0 0.0
    %1251 = vmatpush1.msra.mxu0 0.0
    %1252 = vmatprep.subr.mxu0 0.0
    %1253 = vmatpush1.msra.mxu0 0.0
    %1254 = vmatprep.subr.mxu0 0.0
    %1255 = vmatpush1.msra.mxu0 0.0
    %1256 = vmatprep.subr.mxu0 0.0
    %1257 = vmatpush1.msra.mxu0 0.0
    %1258 = vmatprep.subr.mxu0 0.0
    %1259 = vmatpush1.msra.mxu0 0.0
    %1260 = vmatprep.subr.mxu0 0.0
    %1261 = vmatpush1.msra.mxu0 0.0
    %1262 = vmatprep.subr.mxu0 0.0
    %1263 = vmatpush1.msra.mxu0 0.0
    %1264 = vmatprep.subr.mxu0 0.0
    %1265 = vmatpush1.msra.mxu0 0.0
    %1266 = vmatprep.subr.mxu0 0.0
    %1267 = vmatpush1.msra.mxu0 0.0
    %1268 = vmatprep.subr.mxu0 0.0
    %1269 = vmatpush1.msra.mxu0 0.0
    %1270 = vmatprep.subr.mxu0 0.0
    %1271 = vmatpush1.msra.mxu0 0.0
    %1272 = vmatprep.mubr.f32.mxu0 0.0
    %1273 = vmatmul.mubr.f32.gmra.mrb[0].mxu0 %v972
    %v1274 = vpop.f32.mrb[0].mxu0
    %v1275 = vadd.f32 0.0, %v1274
    %v1276 = vpop.f32.mrb[0].mxu0
    %1277 = vdwg.mxu0
    %v1278 = vadd.f32 %v498, %v1275
    %v1279 = vsel %vm147, %v1278, 0.0
    %1280 = vadd.xlane.f32.xlu0 %v1279
    %v1281 = vpop.xlane.xlu0 %1280
    %v1282 = vrcp.pop 16.0
    %v1283 = vmul.f32 %v1281, %v1282
    %v1284 = vsub.f32 %v1278, %v1283
    %v1285 = vmul.f32 %v1284, %v1284
    %v1286 = vsel %vm147, %v1285, 0.0
    %1287 = vadd.xlane.f32.xlu0 %v1286
    %v1288 = vpop.xlane.xlu0 %1287
    %v1289 = vmul.f32 %v1288, %v1282
    %v1290 = vadd.f32 %v1289, 1e-05
    %v1291 = vrsqrt.pop %v1290
    %v1292 = vmul.f32 %v1284, %v1291
    %v1293 = vlaneseq
    %v1294 = vshrl.u32 %v1293, 7
    %v1295 = vsub.s32 4, %v1294
    %v1296 = vrot.slane %v54, %v1295
    %v1297 = vmul.f32 %v1292, %v1296
    %v1298 = vlaneseq
    %v1299 = vshrl.u32 %v1298, 7
    %v1300 = vsub.s32 5, %v1299
    %v1301 = vrot.slane %v54, %v1300
    %v1302 = vadd.f32 %v1297, %v1301
    %v1303 = vld [vmem:[%s11] sm:$0xff]
    %v1304 = vld [vmem:[%s11 + $0x8] sm:$0xff]
    %v1305 = vlaneseq
    %v1306 = vshrl.u32 %v1305, 7
    %v1307 = vsub.s32 0, %v1306
    %v1308 = vrot.slane %v55, %v1307
    %v1310 = vsel %vm147, %v1302, 0
    %1312 = vmatprep.subr.mxu0 0.0
    %1313 = vmatpush1.msra.mxu0 %v1303
    %1314 = vmatprep.subr.mxu0 0.0
    %1315 = vmatpush1.msra.mxu0 %v1304
    %1316 = vmatprep.subr.mxu0 0.0
    %1317 = vmatpush1.msra.mxu0 0.0
    %1318 = vmatprep.subr.mxu0 0.0
    %1319 = vmatpush1.msra.mxu0 0.0
    %1320 = vmatprep.subr.mxu0 0.0
    %1321 = vmatpush1.msra.mxu0 0.0
    %1322 = vmatprep.subr.mxu0 0.0
    %1323 = vmatpush1.msra.mxu0 0.0
    %1324 = vmatprep.subr.mxu0 0.0
    %1325 = vmatpush1.msra.mxu0 0.0
    %1326 = vmatprep.subr.mxu0 0.0
    %1327 = vmatpush1.msra.mxu0 0.0
    %1328 = vmatprep.subr.mxu0 0.0
    %1329 = vmatpush1.msra.mxu0 0.0
    %1330 = vmatprep.subr.mxu0 0.0
    %1331 = vmatpush1.msra.mxu0 0.0
    %1332 = vmatprep.subr.mxu0 0.0
    %1333 = vmatpush1.msra.mxu0 0.0
    %1334 = vmatprep.subr.mxu0 0.0
    %1335 = vmatpush1.msra.mxu0 0.0
    %1336 = vmatprep.subr.mxu0 0.0
    %1337 = vmatpush1.msra.mxu0 0.0
    %1338 = vmatprep.subr.mxu0 0.0
    %1339 = vmatpush1.msra.mxu0 0.0
    %1340 = vmatprep.subr.mxu0 0.0
    %1341 = vmatpush1.msra.mxu0 0.0
    %1342 = vmatprep.subr.mxu0 0.0
    %1343 = vmatpush1.msra.mxu0 0.0
    %1344 = vmatprep.subr.mxu0 0.0
    %1345 = vmatpush1.msra.mxu0 0.0
    %1346 = vmatprep.subr.mxu0 0.0
    %1347 = vmatpush1.msra.mxu0 0.0
    %1348 = vmatprep.subr.mxu0 0.0
    %1349 = vmatpush1.msra.mxu0 0.0
    %1350 = vmatprep.subr.mxu0 0.0
    %1351 = vmatpush1.msra.mxu0 0.0
    %1352 = vmatprep.subr.mxu0 0.0
    %1353 = vmatpush1.msra.mxu0 0.0
    %1354 = vmatprep.subr.mxu0 0.0
    %1355 = vmatpush1.msra.mxu0 0.0
    %1356 = vmatprep.subr.mxu0 0.0
    %1357 = vmatpush1.msra.mxu0 0.0
    %1358 = vmatprep.subr.mxu0 0.0
    %1359 = vmatpush1.msra.mxu0 0.0
    %1360 = vmatprep.subr.mxu0 0.0
    %1361 = vmatpush1.msra.mxu0 0.0
    %1362 = vmatprep.subr.mxu0 0.0
    %1363 = vmatpush1.msra.mxu0 0.0
    %1364 = vmatprep.subr.mxu0 0.0
    %1365 = vmatpush1.msra.mxu0 0.0
    %1366 = vmatprep.subr.mxu0 0.0
    %1367 = vmatpush1.msra.mxu0 0.0
    %1368 = vmatprep.subr.mxu0 0.0
    %1369 = vmatpush1.msra.mxu0 0.0
    %1370 = vmatprep.subr.mxu0 0.0
    %1371 = vmatpush1.msra.mxu0 0.0
    %1372 = vmatprep.subr.mxu0 0.0
    %1373 = vmatpush1.msra.mxu0 0.0
    %1374 = vmatprep.subr.mxu0 0.0
    %1375 = vmatpush1.msra.mxu0 0.0
    %1376 = vmatprep.mubr.f32.mxu0 0.0
    %1377 = vmatmul.mubr.f32.gmra.mrb[0].mxu0 %v1310
    %v1378 = vpop.f32.mrb[0].mxu0
    %v1379 = vadd.f32 %v1308, %v1378
    %v1380 = vpop.f32.mrb[0].mxu0
    %1381 = vdwg.mxu0
    %v1382 = vmax.f32 %v1379, 0.0
    %v1383 = vld [vmem:[%s12] sm:$0xff]
    %v1384 = vld [vmem:[%s12 + $0x8] sm:$0xff]
    %v1385 = vld [vmem:[%s12 + $0x10] sm:$0xff]
    %v1386 = vld [vmem:[%s12 + $0x18] sm:$0xff]
    %v1387 = vld [vmem:[%s12 + $0x20] sm:$0xff]
    %v1388 = vld [vmem:[%s12 + $0x28] sm:$0xff]
    %v1389 = vld [vmem:[%s12 + $0x30] sm:$0xff]
    %v1390 = vld [vmem:[%s12 + $0x38] sm:$0xff]
    %v1391 = vlaneseq
    %v1392 = vshrl.u32 %v1391, 7
    %v1393 = vsub.s32 1, %v1392
    %v1394 = vrot.slane %v55, %v1393
    %vm1395 = vcmask 523264
    %v1397 = vsel %vm1395, %v1382, 0
    %1399 = vmatprep.subr.mxu0 0.0
    %1400 = vmatpush1.msra.mxu0 %v1383
    %1401 = vmatprep.subr.mxu0 0.0
    %1402 = vmatpush1.msra.mxu0 %v1384
    %1403 = vmatprep.subr.mxu0 0.0
    %1404 = vmatpush1.msra.mxu0 %v1385
    %1405 = vmatprep.subr.mxu0 0.0
    %1406 = vmatpush1.msra.mxu0 %v1386
    %1407 = vmatprep.subr.mxu0 0.0
    %1408 = vmatpush1.msra.mxu0 %v1387
    %1409 = vmatprep.subr.mxu0 0.0
    %1410 = vmatpush1.msra.mxu0 %v1388
    %1411 = vmatprep.subr.mxu0 0.0
    %1412 = vmatpush1.msra.mxu0 %v1389
    %1413 = vmatprep.subr.mxu0 0.0
    %1414 = vmatpush1.msra.mxu0 %v1390
    %1415 = vmatprep.subr.mxu0 0.0
    %1416 = vmatpush1.msra.mxu0 0.0
    %1417 = vmatprep.subr.mxu0 0.0
    %1418 = vmatpush1.msra.mxu0 0.0
    %1419 = vmatprep.subr.mxu0 0.0
    %1420 = vmatpush1.msra.mxu0 0.0
    %1421 = vmatprep.subr.mxu0 0.0
    %1422 = vmatpush1.msra.mxu0 0.0
    %1423 = vmatprep.subr.mxu0 0.0
    %1424 = vmatpush1.msra.mxu0 0.0
    %1425 = vmatprep.subr.mxu0 0.0
    %1426 = vmatpush1.msra.mxu0 0.0
    %1427 = vmatprep.subr.mxu0 0.0
    %1428 = vmatpush1.msra.mxu0 0.0
    %1429 = vmatprep.subr.mxu0 0.0
    %1430 = vmatpush1.msra.mxu0 0.0
    %1431 = vmatprep.subr.mxu0 0.0
    %1432 = vmatpush1.msra.mxu0 0.0
    %1433 = vmatprep.subr.mxu0 0.0
    %1434 = vmatpush1.msra.mxu0 0.0
    %1435 = vmatprep.subr.mxu0 0.0
    %1436 = vmatpush1.msra.mxu0 0.0
    %1437 = vmatprep.subr.mxu0 0.0
    %1438 = vmatpush1.msra.mxu0 0.0
    %1439 = vmatprep.subr.mxu0 0.0
    %1440 = vmatpush1.msra.mxu0 0.0
    %1441 = vmatprep.subr.mxu0 0.0
    %1442 = vmatpush1.msra.mxu0 0.0
    %1443 = vmatprep.subr.mxu0 0.0
    %1444 = vmatpush1.msra.mxu0 0.0
    %1445 = vmatprep.subr.mxu0 0.0
    %1446 = vmatpush1.msra.mxu0 0.0
    %1447 = vmatprep.subr.mxu0 0.0
    %1448 = vmatpush1.msra.mxu0 0.0
    %1449 = vmatprep.subr.mxu0 0.0
    %1450 = vmatpush1.msra.mxu0 0.0
    %1451 = vmatprep.subr.mxu0 0.0
    %1452 = vmatpush1.msra.mxu0 0.0
    %1453 = vmatprep.subr.mxu0 0.0
    %1454 = vmatpush1.msra.mxu0 0.0
    %1455 = vmatprep.subr.mxu0 0.0
    %1456 = vmatpush1.msra.mxu0 0.0
    %1457 = vmatprep.subr.mxu0 0.0
    %1458 = vmatpush1.msra.mxu0 0.0
    %1459 = vmatprep.subr.mxu0 0.0
    %1460 = vmatpush1.msra.mxu0 0.0
    %1461 = vmatprep.subr.mxu0 0.0
    %1462 = vmatpush1.msra.mxu0 0.0
    %1463 = vmatprep.mubr.f32.mxu0 0.0
    %1464 = vmatmul.mubr.f32.gmra.mrb[0].mxu0 %v1397
    %v1465 = vpop.f32.mrb[0].mxu0
    %v1466 = vadd.f32 %v1394, %v1465
    %v1467 = vpop.f32.mrb[0].mxu0
    %1468 = vdwg.mxu0
    %v1469 = vadd.f32 %v1302, %v1466
    %v1470 = vsel %vm147, %v1469, 0.0
    %1471 = vadd.xlane.f32.xlu0 %v1470
    %v1472 = vpop.xlane.xlu0 %1471
    %v1473 = vmul.f32 %v1472, %v1282
    %v1474 = vsub.f32 %v1469, %v1473
    %v1475 = vmul.f32 %v1474, %v1474
    %v1476 = vsel %vm147, %v1475, 0.0
    %1477 = vadd.xlane.f32.xlu0 %v1476
    %v1478 = vpop.xlane.xlu0 %1477
    %v1479 = vmul.f32 %v1478, %v1282
    %v1480 = vadd.f32 %v1479, 1e-05
    %v1481 = vrsqrt.pop %v1480
    %v1482 = vmul.f32 %v1474, %v1481
    %v1483 = vlaneseq
    %v1484 = vshrl.u32 %v1483, 7
    %v1485 = vsub.s32 6, %v1484
    %v1486 = vrot.slane %v54, %v1485
    %v1487 = vmul.f32 %v1482, %v1486
    %v1488 = vlaneseq
    %v1489 = vshrl.u32 %v1488, 7
    %v1490 = vsub.s32 7, %v1489
    %v1491 = vrot.slane %v54, %v1490
    %v1492 = vadd.f32 %v1487, %v1491
    %v1493 = vld [vmem:[%s13] sm:$0xff]
    %v1494 = vld [vmem:[%s13 + $0x8] sm:$0xff]
    %v1495 = vlaneseq
    %v1496 = vshrl.u32 %v1495, 7
    %v1497 = vsub.s32 2, %v1496
    %v1498 = vrot.slane %v55, %v1497
    %v1500 = vsel %vm147, %v1492, 0
    %1502 = vmatprep.subr.mxu0 0.0
    %1503 = vmatpush1.msra.mxu0 %v1493
    %1504 = vmatprep.subr.mxu0 0.0
    %1505 = vmatpush1.msra.mxu0 %v1494
    %1506 = vmatprep.subr.mxu0 0.0
    %1507 = vmatpush1.msra.mxu0 0.0
    %1508 = vmatprep.subr.mxu0 0.0
    %1509 = vmatpush1.msra.mxu0 0.0
    %1510 = vmatprep.subr.mxu0 0.0
    %1511 = vmatpush1.msra.mxu0 0.0
    %1512 = vmatprep.subr.mxu0 0.0
    %1513 = vmatpush1.msra.mxu0 0.0
    %1514 = vmatprep.subr.mxu0 0.0
    %1515 = vmatpush1.msra.mxu0 0.0
    %1516 = vmatprep.subr.mxu0 0.0
    %1517 = vmatpush1.msra.mxu0 0.0
    %1518 = vmatprep.subr.mxu0 0.0
    %1519 = vmatpush1.msra.mxu0 0.0
    %1520 = vmatprep.subr.mxu0 0.0
    %1521 = vmatpush1.msra.mxu0 0.0
    %1522 = vmatprep.subr.mxu0 0.0
    %1523 = vmatpush1.msra.mxu0 0.0
    %1524 = vmatprep.subr.mxu0 0.0
    %1525 = vmatpush1.msra.mxu0 0.0
    %1526 = vmatprep.subr.mxu0 0.0
    %1527 = vmatpush1.msra.mxu0 0.0
    %1528 = vmatprep.subr.mxu0 0.0
    %1529 = vmatpush1.msra.mxu0 0.0
    %1530 = vmatprep.subr.mxu0 0.0
    %1531 = vmatpush1.msra.mxu0 0.0
    %1532 = vmatprep.subr.mxu0 0.0
    %1533 = vmatpush1.msra.mxu0 0.0
    %1534 = vmatprep.subr.mxu0 0.0
    %1535 = vmatpush1.msra.mxu0 0.0
    %1536 = vmatprep.subr.mxu0 0.0
    %1537 = vmatpush1.msra.mxu0 0.0
    %1538 = vmatprep.subr.mxu0 0.0
    %1539 = vmatpush1.msra.mxu0 0.0
    %1540 = vmatprep.subr.mxu0 0.0
    %1541 = vmatpush1.msra.mxu0 0.0
    %1542 = vmatprep.subr.mxu0 0.0
    %1543 = vmatpush1.msra.mxu0 0.0
    %1544 = vmatprep.subr.mxu0 0.0
    %1545 = vmatpush1.msra.mxu0 0.0
    %1546 = vmatprep.subr.mxu0 0.0
    %1547 = vmatpush1.msra.mxu0 0.0
    %1548 = vmatprep.subr.mxu0 0.0
    %1549 = vmatpush1.msra.mxu0 0.0
    %1550 = vmatprep.subr.mxu0 0.0
    %1551 = vmatpush1.msra.mxu0 0.0
    %1552 = vmatprep.subr.mxu0 0.0
    %1553 = vmatpush1.msra.mxu0 0.0
    %1554 = vmatprep.subr.mxu0 0.0
    %1555 = vmatpush1.msra.mxu0 0.0
    %1556 = vmatprep.subr.mxu0 0.0
    %1557 = vmatpush1.msra.mxu0 0.0
    %1558 = vmatprep.subr.mxu0 0.0
    %1559 = vmatpush1.msra.mxu0 0.0
    %1560 = vmatprep.subr.mxu0 0.0
    %1561 = vmatpush1.msra.mxu0 0.0
    %1562 = vmatprep.subr.mxu0 0.0
    %1563 = vmatpush1.msra.mxu0 0.0
    %1564 = vmatprep.subr.mxu0 0.0
    %1565 = vmatpush1.msra.mxu0 0.0
    %1566 = vmatprep.mubr.f32.mxu0 0.0
    %1567 = vmatmul.mubr.f32.gmra.mrb[0].mxu0 %v1500
    %v1568 = vpop.f32.mrb[0].mxu0
    %v1569 = vadd.f32 %v1498, %v1568
    %v1570 = vpop.f32.mrb[0].mxu0
    %1571 = vdwg.mxu0
    %v1572 = vmax.f32 %v1569, 0.0
    %v1573 = vld [vmem:[%s14] sm:$0xff]
    %v1574 = vlaneseq
    %v1575 = vshrl.u32 %v1574, 7
    %v1576 = vsub.s32 3, %v1575
    %v1577 = vrot.slane %v55, %v1576
    %v1579 = vsel %vm61, %v1572, 0
    %1581 = vmatprep.subr.mxu0 0.0
    %1582 = vmatpush1.msra.mxu0 %v1573
    %1583 = vmatprep.subr.mxu0 0.0
    %1584 = vmatpush1.msra.mxu0 0.0
    %1585 = vmatprep.subr.mxu0 0.0
    %1586 = vmatpush1.msra.mxu0 0.0
    %1587 = vmatprep.subr.mxu0 0.0
    %1588 = vmatpush1.msra.mxu0 0.0
    %1589 = vmatprep.subr.mxu0 0.0
    %1590 = vmatpush1.msra.mxu0 0.0
    %1591 = vmatprep.subr.mxu0 0.0
    %1592 = vmatpush1.msra.mxu0 0.0
    %1593 = vmatprep.subr.mxu0 0.0
    %1594 = vmatpush1.msra.mxu0 0.0
    %1595 = vmatprep.subr.mxu0 0.0
    %1596 = vmatpush1.msra.mxu0 0.0
    %1597 = vmatprep.subr.mxu0 0.0
    %1598 = vmatpush1.msra.mxu0 0.0
    %1599 = vmatprep.subr.mxu0 0.0
    %1600 = vmatpush1.msra.mxu0 0.0
    %1601 = vmatprep.subr.mxu0 0.0
    %1602 = vmatpush1.msra.mxu0 0.0
    %1603 = vmatprep.subr.mxu0 0.0
    %1604 = vmatpush1.msra.mxu0 0.0
    %1605 = vmatprep.subr.mxu0 0.0
    %1606 = vmatpush1.msra.mxu0 0.0
    %1607 = vmatprep.subr.mxu0 0.0
    %1608 = vmatpush1.msra.mxu0 0.0
    %1609 = vmatprep.subr.mxu0 0.0
    %1610 = vmatpush1.msra.mxu0 0.0
    %1611 = vmatprep.subr.mxu0 0.0
    %1612 = vmatpush1.msra.mxu0 0.0
    %1613 = vmatprep.subr.mxu0 0.0
    %1614 = vmatpush1.msra.mxu0 0.0
    %1615 = vmatprep.subr.mxu0 0.0
    %1616 = vmatpush1.msra.mxu0 0.0
    %1617 = vmatprep.subr.mxu0 0.0
    %1618 = vmatpush1.msra.mxu0 0.0
    %1619 = vmatprep.subr.mxu0 0.0
    %1620 = vmatpush1.msra.mxu0 0.0
    %1621 = vmatprep.subr.mxu0 0.0
    %1622 = vmatpush1.msra.mxu0 0.0
    %1623 = vmatprep.subr.mxu0 0.0
    %1624 = vmatpush1.msra.mxu0 0.0
    %1625 = vmatprep.subr.mxu0 0.0
    %1626 = vmatpush1.msra.mxu0 0.0
    %1627 = vmatprep.subr.mxu0 0.0
    %1628 = vmatpush1.msra.mxu0 0.0
    %1629 = vmatprep.subr.mxu0 0.0
    %1630 = vmatpush1.msra.mxu0 0.0
    %1631 = vmatprep.subr.mxu0 0.0
    %1632 = vmatpush1.msra.mxu0 0.0
    %1633 = vmatprep.subr.mxu0 0.0
    %1634 = vmatpush1.msra.mxu0 0.0
    %1635 = vmatprep.subr.mxu0 0.0
    %1636 = vmatpush1.msra.mxu0 0.0
    %1637 = vmatprep.subr.mxu0 0.0
    %1638 = vmatpush1.msra.mxu0 0.0
    %1639 = vmatprep.subr.mxu0 0.0
    %1640 = vmatpush1.msra.mxu0 0.0
    %1641 = vmatprep.subr.mxu0 0.0
    %1642 = vmatpush1.msra.mxu0 0.0
    %1643 = vmatprep.subr.mxu0 0.0
    %1644 = vmatpush1.msra.mxu0 0.0
    %1645 = vmatprep.mubr.f32.mxu0 0.0
    %1646 = vmatmul.mubr.f32.gmra.mrb[0].mxu0 %v1579
    %v1647 = vpop.f32.mrb[0].mxu0
    %v1648 = vadd.f32 %v1577, %v1647
    %v1649 = vpop.f32.mrb[0].mxu0
    %1650 = vdwg.mxu0
    %1652 = vrot.lane.b32.xlu0 %v1648, 16
    %v1653 = vpop.permute.xlu0 %1652
    %v1655 = vsel %vm147, %v1492, %v1653
    %vm1656 = vcmask 138240
    %v1657 = vsel %vm1656, %v1655, 0.0
    %1658 = vst [vmem:[#allocation2] sm:$0xff] %v1657
    // Predicated region
    $region66: #{tpu_custom_call.1} parent=1 // pred_check
      _
    $region67: #{tpu_custom_call.1} parent=1 // pred_check_branch
      %1660 = sbr.rel (0) target = $region69
    $region68: #{tpu_custom_call.1} parent=1 // pred_region
      %s1662 = ssub.s32 128, 128
      %1663 = vsyncadd [#allocation3], %s1662
      %s1665 = sshll.u32 [#allocation2], 4
      %s1666 = int_to_ptr.vmem [resolvable:$true] %s1665
      %1668 = dma.vmem_to_hbm [thread:$0]  %s1666, 128, %s16, [#allocation3]
    $region69: #{tpu_custom_call.1} parent=1 // pred_fallthru
      _
    // Predicated region
    $region70: #{tpu_custom_call.1} parent=1 // pred_check
      _
    $region71: #{tpu_custom_call.1} parent=1 // pred_check_branch
      %1670 = sbr.rel (0) target = $region73
    $region72: #{tpu_custom_call.1} parent=1 // pred_region
      %1671 = dma.done [#allocation3], 128
    $region73: #{tpu_custom_call.1} parent=1 // pred_fallthru
      _
    %1672 = vsyncpa [#allocation3], 1

</llo_original>
